<compile_context>
chip_gen: v7x
topology: tpu7x:2x2x1
jax: 0.10.0
libtpu: 0.0.40
codegen_flags: <defaults>
</compile_context>

<pallas_src>
import functools

import numpy as np
import jax
import jax.numpy as jnp
from jax.experimental import pallas as pl
from jax.experimental.pallas import tpu as pltpu

_NEG = -3.0e38  # effectively -inf for pool padding; still representable in bf16


def _sppf_kernel(x_ref, w1_ref, b1_ref, w2_ref, b2_ref, o_ref, *, H, W, pool_dtype):
    """One batch element.

    x_ref : (1, c1, H*W)   bf16 input, spatial flattened onto lanes
    w1_ref: (c_mid, c1)    bf16 cv1 weight with BN1 scale folded in
    b1_ref: (c_mid, 1)     f32  cv1 folded BN1 bias
    w2_ref: (c2, 4*c_mid)  bf16 cv2 weight with BN2 scale folded in
    b2_ref: (c2, 1)        f32  cv2 folded BN2 bias
    o_ref : (1, c2, H*W)   output (caller dtype)
    """
    HW = H * W

    # ---- cv1: 1x1 conv (+ folded BN) + SiLU (bf16 MXU operands, f32 accum) ----
    t = jnp.dot(w1_ref[...], x_ref[0], preferred_element_type=jnp.float32)
    t = t + b1_ref[...]
    a0 = (t * pl.reciprocal(1.0 + jnp.exp(-t), approx=True)).astype(pool_dtype)

    # ---- 5x5 / stride 1 / pad 2 max pool x3: separable shift-and-max ----------
    # Boundary masks: (1, HW), computed once, broadcast along sublanes for free.
    pos = jax.lax.broadcasted_iota(jnp.int32, (1, HW), 1)      # 0..HW-1
    col = pos % W                                               # w index
    m_r1, m_r2 = col < W - 1, col < W - 2                       # look right 1 / 2
    m_l1, m_l2 = col >= 1, col >= 2                             # look left  1 / 2
    m_d1, m_d2 = pos < (H - 1) * W, pos < (H - 2) * W           # row below  1 / 2
    m_u1, m_u2 = pos >= W, pos >= 2 * W                         # row above  1 / 2

    neg = jnp.asarray(_NEG, dtype=pool_dtype)

    def shifted(v, d, valid):
        # r[..., l] = v[..., l + d] (XLU lane rotate), then boundary-masked to -inf.
        return jnp.where(valid, pltpu.roll(v, shift=(-d) % HW, axis=1), neg)

    def maxpool5(v):
        h = v                                            # horizontal, within a row
        h = jnp.maximum(h, shifted(v, 1, m_r1))
        h = jnp.maximum(h, shifted(v, 2, m_r2))
        h = jnp.maximum(h, shifted(v, -1, m_l1))
        h = jnp.maximum(h, shifted(v, -2, m_l2))
        o = h                                            # vertical, across rows
        o = jnp.maximum(o, shifted(h, W, m_d1))
        o = jnp.maximum(o, shifted(h, 2 * W, m_d2))
        o = jnp.maximum(o, shifted(h, -W, m_u1))
        o = jnp.maximum(o, shifted(h, -2 * W, m_u2))
        return o

    a1 = maxpool5(a0)
    a2 = maxpool5(a1)
    a3 = maxpool5(a2)

    # ---- cv2: concat + 1x1 conv as ONE matmul (K = 4*c_mid) + BN + SiLU -------
    cat = jnp.concatenate([a0, a1, a2, a3], axis=0).astype(jnp.bfloat16)
    acc = jnp.dot(w2_ref[...], cat, preferred_element_type=jnp.float32)
    acc = acc + b2_ref[...]
    o_ref[0] = (acc * pl.reciprocal(1.0 + jnp.exp(-acc), approx=True)).astype(o_ref.dtype)


def _default_pool_dtype():
    # bf16 pooling halves XLU/VALU issue counts, but v4/v5 VPUs have no bf16 path.
    try:
        kind = jax.devices()[0].device_kind.lower()
    except Exception:
        return jnp.float32
    if any(g in kind for g in ("v2", "v3", "v4", "v5")):
        return jnp.float32
    return jnp.bfloat16


def sppf(x, params, eps=1e-5, pool_dtype=None):
    """SPPF forward. x: (N, c1, H, W) NCHW; params: conv weights + BN running stats."""
    N, c1, H, W = x.shape
    c_mid = c1 // 2
    c2 = params["w2"].shape[0]
    HW = H * W
    assert params["w2"].shape[1] == 4 * c_mid
    if pool_dtype is None:
        pool_dtype = _default_pool_dtype()

    # Fold inference-mode BatchNorm into the 1x1 convs; bf16 weights, f32 biases.
    s1 = params["g1"] / jnp.sqrt(params["v1"] + eps)
    w1f = (params["w1"] * s1[:, None]).astype(jnp.bfloat16)            # (c_, c1)
    b1f = (params["b1"] - params["m1"] * s1)[:, None]                  # (c_, 1) f32
    s2 = params["g2"] / jnp.sqrt(params["v2"] + eps)
    w2f = (params["w2"] * s2[:, None]).astype(jnp.bfloat16)            # (c2, 4c_)
    b2f = (params["b2"] - params["m2"] * s2)[:, None]                  # (c2, 1) f32

    # bf16 HBM I/O for the big tensor; spatial axis flattened onto the lane dim.
    x2 = x.reshape(N, c1, HW).astype(jnp.bfloat16)

    out_isz = jnp.dtype(x.dtype).itemsize
    pool_isz = jnp.dtype(pool_dtype).itemsize
    # VMEM estimate: double-buffered in/out blocks + weights + pool/concat temps.
    vmem_est = (2 * c1 * HW * 2 + 2 * c2 * HW * out_isz
                + 2 * (w1f.size + w2f.size) * 2 + 2 * (c_mid + c2) * 4
                + 12 * c_mid * HW * pool_isz + 2 * c2 * HW * 4)
    vmem_limit = int(min(max(2 * vmem_est, 32 * 1024 * 1024), 100 * 1024 * 1024))

    flops = 2 * N * HW * c_mid * (c1 + 4 * c2) + 3 * 8 * N * c_mid * HW
    bytes_accessed = (x2.size * 2 + N * c2 * HW * out_isz
                      + (w1f.size + w2f.size) * 2 + (c_mid + c2) * 2 * 4)

    kernel = functools.partial(_sppf_kernel, H=H, W=W, pool_dtype=pool_dtype)
    out = pl.pallas_call(
        kernel,
        out_shape=jax.ShapeDtypeStruct((N, c2, HW), x.dtype),
        grid_spec=pltpu.PrefetchScalarGridSpec(
            num_scalar_prefetch=0,
            grid=(N,),
            in_specs=[
                pl.BlockSpec((1, c1, HW), lambda n: (n, 0, 0)),
                pl.BlockSpec((c_mid, c1), lambda n: (0, 0)),
                pl.BlockSpec((c_mid, 1), lambda n: (0, 0)),
                pl.BlockSpec((c2, 4 * c_mid), lambda n: (0, 0)),
                pl.BlockSpec((c2, 1), lambda n: (0, 0)),
            ],
            out_specs=pl.BlockSpec((1, c2, HW), lambda n: (n, 0, 0)),
        ),
        compiler_params=pltpu.CompilerParams(
            dimension_semantics=("parallel",),
            vmem_limit_bytes=vmem_limit),
        cost_estimate=pl.CostEstimate(
            flops=int(flops),
            transcendentals=int(N * HW * (c_mid + c2)),
            bytes_accessed=int(bytes_accessed)),
    )(x2, w1f, b1f, w2f, b2f)
    # TODO(synk): for production H*W / v7x's 64 MiB VMEM, additionally tile the
    # spatial axis across a second "parallel" grid dim (6-row halo for the three
    # chained radius-2 pools, lane width a multiple of 128) and single-buffer the
    # grid-invariant weight blocks (pipeline_mode=pl.Buffered(1)).
    return out.reshape(N, c2, H, W)


def sppf_ref(x, params, eps=1e-5):
    """Pure-JAX f32 reference mirroring the PyTorch module (inference-mode BN)."""
    def conv_bn_silu(z, w, g, b, m, v):
        y = jnp.einsum("oc,nchw->nohw", w, z)
        y = (y - m[None, :, None, None]) * (g / jnp.sqrt(v + eps))[None, :, None, None]
        y = y + b[None, :, None, None]
        return y * (1.0 / (1.0 + jnp.exp(-y)))

    def maxpool5(z):
        return jax.lax.reduce_window(
            z, -jnp.inf, jax.lax.max,
            window_dimensions=(1, 1, 5, 5),
            window_strides=(1, 1, 1, 1),
            padding=((0, 0), (0, 0), (2, 2), (2, 2)))

    y = conv_bn_silu(x, params["w1"], params["g1"], params["b1"],
                     params["m1"], params["v1"])
    y1 = maxpool5(y)
    y2 = maxpool5(y1)
    y3 = maxpool5(y2)
    cat = jnp.concatenate([y, y1, y2, y3], axis=1)
    return conv_bn_silu(cat, params["w2"], params["g2"], params["b2"],
                        params["m2"], params["v2"])


if __name__ == "__main__":
    key = jax.random.PRNGKey(0)
    # Small but tile-friendly shapes: c_mid=32 keeps the in-kernel channel concat
    # aligned to the bf16 (16,128) tiling; H*W=256 keeps all stores lane-dense.
    N, c1, c2, H, W = 2, 64, 64, 16, 16
    c_ = c1 // 2
    ks = jax.random.split(key, 11)
    x = jax.random.normal(ks[0], (N, c1, H, W), jnp.float32)
    # Pre-round x to bf16-representable values so the comparison vs the f32
    # reference mostly measures the kernel's intentional bf16 weight/activation math.
    x = x.astype(jnp.bfloat16).astype(jnp.float32)
    params = dict(
        w1=0.2 * jax.random.normal(ks[1], (c_, c1), jnp.float32),
        g1=1.0 + 0.1 * jax.random.normal(ks[2], (c_,), jnp.float32),
        b1=0.1 * jax.random.normal(ks[3], (c_,), jnp.float32),
        m1=0.1 * jax.random.normal(ks[4], (c_,), jnp.float32),
        v1=0.5 + jax.random.uniform(ks[5], (c_,), jnp.float32),
        w2=0.2 * jax.random.normal(ks[6], (c2, 4 * c_), jnp.float32),
        g2=1.0 + 0.1 * jax.random.normal(ks[7], (c2,), jnp.float32),
        b2=0.1 * jax.random.normal(ks[8], (c2,), jnp.float32),
        m2=0.1 * jax.random.normal(ks[9], (c2,), jnp.float32),
        v2=0.5 + jax.random.uniform(ks[10], (c2,), jnp.float32),
    )

    try:
        out = jax.block_until_ready(sppf(x, params))
    except Exception:
        # Hardware/toolchain fallback: if packed-bf16 lane rotates are unsupported
        # on this generation, redo pooling in f32 (bf16 I/O + MXU operands kept).
        out = jax.block_until_ready(sppf(x, params, pool_dtype=jnp.float32))

    ref = sppf_ref(x, params)
    # Loose tolerance: the kernel intentionally uses bf16 weights/activations on the
    # MXU/pooling path while the reference is pure f32; logic bugs give O(1) errors.
    np.testing.assert_allclose(np.asarray(out), np.asarray(ref), rtol=1e-1, atol=1.5e-1)
    print("KERNEL_OK")
</pallas_src>

<mosaic_0001>
module attributes {stable_mosaic.version = 11 : i64} {
  func.func @_sppf_kernel(%arg0: i32, %arg1: memref<1x64x256xbf16, #tpu.memory_space<vmem>>, %arg2: memref<32x64xbf16, #tpu.memory_space<vmem>>, %arg3: memref<32x1xf32, #tpu.memory_space<vmem>>, %arg4: memref<64x128xbf16, #tpu.memory_space<vmem>>, %arg5: memref<64x1xf32, #tpu.memory_space<vmem>>, %arg6: memref<1x64x256xf32, #tpu.memory_space<vmem>>) attributes {dimension_semantics = [#tpu.dimension_semantics<parallel>], iteration_bounds = array<i64: 2>, scalar_prefetch = 0 : i64, scratch_operands = 0 : i64, tpu.core_type = #tpu.core_type<tc>, window_params = [{transform_indices = @transform_0, window_bounds = array<i64: 1, 64, 256>}, {pipeline_mode = #tpu.pipeline_mode<synchronous>, transform_indices = @transform_1, window_bounds = array<i64: 32, 64>}, {pipeline_mode = #tpu.pipeline_mode<synchronous>, transform_indices = @transform_2, window_bounds = array<i64: 32, 1>}, {pipeline_mode = #tpu.pipeline_mode<synchronous>, transform_indices = @transform_3, window_bounds = array<i64: 64, 128>}, {pipeline_mode = #tpu.pipeline_mode<synchronous>, transform_indices = @transform_4, window_bounds = array<i64: 64, 1>}, {transform_indices = @transform_5, window_bounds = array<i64: 1, 64, 256>}]} {
    %c0 = arith.constant 0 : index
    %c0_0 = arith.constant 0 : index
    %0 = vector.load %arg2[%c0, %c0_0] : memref<32x64xbf16, #tpu.memory_space<vmem>>, vector<32x64xbf16>
    %c0_1 = arith.constant 0 : index
    %c0_2 = arith.constant 0 : index
    %c0_3 = arith.constant 0 : index
    %1 = vector.load %arg1[%c0_1, %c0_2, %c0_3] : memref<1x64x256xbf16, #tpu.memory_space<vmem>>, vector<1x64x256xbf16>
    %2 = vector.shape_cast %1 : vector<1x64x256xbf16> to vector<64x256xbf16>
    %cst = arith.constant dense<0.000000e+00> : vector<32x256xf32>
    %3 = tpu.matmul %0, %2, %cst {dimension_numbers = #tpu.dot_dimension_numbers<[1], [0], [0], [1], [0, 0, 1, 1], [], []>} : vector<32x64xbf16>, vector<64x256xbf16>, vector<32x256xf32> -> vector<32x256xf32>
    %c0_4 = arith.constant 0 : index
    %c0_5 = arith.constant 0 : index
    %4 = vector.load %arg3[%c0_4, %c0_5] : memref<32x1xf32, #tpu.memory_space<vmem>>, vector<32x1xf32>
    %5 = vector.broadcast %4 : vector<32x1xf32> to vector<32x256xf32>
    %6 = arith.addf %3, %5 : vector<32x256xf32>
    %cst_6 = arith.constant 0.000000e+00 : f32
    %7 = vector.broadcast %cst_6 : f32 to vector<32x256xf32>
    %8 = arith.subf %7, %6 : vector<32x256xf32>
    %9 = math.exp %8 : vector<32x256xf32>
    %cst_7 = arith.constant 1.000000e+00 : f32
    %10 = vector.broadcast %cst_7 : f32 to vector<32x256xf32>
    %11 = arith.addf %10, %9 : vector<32x256xf32>
    %12 = tpu.reciprocal %11 {approx = true} : vector<32x256xf32> -> vector<32x256xf32>
    %13 = arith.mulf %6, %12 : vector<32x256xf32>
    %14 = arith.truncf %13 : vector<32x256xf32> to vector<32x256xbf16>
    %15 = tpu.iota {dimensions = array<i32: 1>} : vector<1x256xi32>
    %c16_i32 = arith.constant 16 : i32
    %c0_i32 = arith.constant 0 : i32
    %16 = arith.cmpi eq, %c16_i32, %c0_i32 : i32
    %c1_i32 = arith.constant 1 : i32
    %17 = arith.select %16, %c1_i32, %c16_i32 : i32
    %18 = vector.broadcast %17 : i32 to vector<1x256xi32>
    %19 = arith.remsi %15, %18 : vector<1x256xi32>
    %c0_i32_8 = arith.constant 0 : i32
    %20 = vector.broadcast %c0_i32_8 : i32 to vector<1x256xi32>
    %21 = arith.cmpi ne, %19, %20 : vector<1x256xi32>
    %c0_i32_9 = arith.constant 0 : i32
    %22 = vector.broadcast %c0_i32_9 : i32 to vector<1x256xi32>
    %23 = arith.cmpi slt, %19, %22 : vector<1x256xi32>
    %c0_i32_10 = arith.constant 0 : i32
    %24 = arith.cmpi slt, %17, %c0_i32_10 : i32
    %25 = vector.broadcast %24 : i1 to vector<1x256xi1>
    %26 = vector.broadcast %25 : vector<1x256xi1> to vector<1x256xi1>
    %27 = arith.xori %23, %26 : vector<1x256xi1>
    %28 = arith.andi %27, %21 : vector<1x256xi1>
    %29 = vector.broadcast %17 : i32 to vector<1x256xi32>
    %30 = arith.addi %19, %29 : vector<1x256xi32>
    %31 = arith.select %28, %30, %19 : vector<1x256xi1>, vector<1x256xi32>
    %c15_i32 = arith.constant 15 : i32
    %32 = vector.broadcast %c15_i32 : i32 to vector<1x256xi32>
    %33 = arith.cmpi slt, %31, %32 : vector<1x256xi32>
    %c14_i32 = arith.constant 14 : i32
    %34 = vector.broadcast %c14_i32 : i32 to vector<1x256xi32>
    %35 = arith.cmpi slt, %31, %34 : vector<1x256xi32>
    %c1_i32_11 = arith.constant 1 : i32
    %36 = vector.broadcast %c1_i32_11 : i32 to vector<1x256xi32>
    %37 = arith.cmpi sge, %31, %36 : vector<1x256xi32>
    %c2_i32 = arith.constant 2 : i32
    %38 = vector.broadcast %c2_i32 : i32 to vector<1x256xi32>
    %39 = arith.cmpi sge, %31, %38 : vector<1x256xi32>
    %c240_i32 = arith.constant 240 : i32
    %40 = vector.broadcast %c240_i32 : i32 to vector<1x256xi32>
    %41 = arith.cmpi slt, %15, %40 : vector<1x256xi32>
    %c224_i32 = arith.constant 224 : i32
    %42 = vector.broadcast %c224_i32 : i32 to vector<1x256xi32>
    %43 = arith.cmpi slt, %15, %42 : vector<1x256xi32>
    %c16_i32_12 = arith.constant 16 : i32
    %44 = vector.broadcast %c16_i32_12 : i32 to vector<1x256xi32>
    %45 = arith.cmpi sge, %15, %44 : vector<1x256xi32>
    %c32_i32 = arith.constant 32 : i32
    %46 = vector.broadcast %c32_i32 : i32 to vector<1x256xi32>
    %47 = arith.cmpi sge, %15, %46 : vector<1x256xi32>
    %c255_i32 = arith.constant 255 : i32
    %48 = tpu.dynamic_rotate %14 by %c255_i32 dim 1 : vector<32x256xbf16>, i32 -> vector<32x256xbf16>
    %cst_13 = arith.constant -3.004060e+38 : bf16
    %49 = vector.shape_cast %33 : vector<1x256xi1> to vector<1x256xi1>
    %50 = vector.broadcast %49 : vector<1x256xi1> to vector<32x256xi1>
    %51 = vector.broadcast %cst_13 : bf16 to vector<32x256xbf16>
    %52 = arith.select %50, %48, %51 : vector<32x256xi1>, vector<32x256xbf16>
    %53 = arith.maximumf %14, %52 : vector<32x256xbf16>
    %c254_i32 = arith.constant 254 : i32
    %54 = tpu.dynamic_rotate %14 by %c254_i32 dim 1 : vector<32x256xbf16>, i32 -> vector<32x256xbf16>
    %cst_14 = arith.constant -3.004060e+38 : bf16
    %55 = vector.shape_cast %35 : vector<1x256xi1> to vector<1x256xi1>
    %56 = vector.broadcast %55 : vector<1x256xi1> to vector<32x256xi1>
    %57 = vector.broadcast %cst_14 : bf16 to vector<32x256xbf16>
    %58 = arith.select %56, %54, %57 : vector<32x256xi1>, vector<32x256xbf16>
    %59 = arith.maximumf %53, %58 : vector<32x256xbf16>
    %c1_i32_15 = arith.constant 1 : i32
    %60 = tpu.dynamic_rotate %14 by %c1_i32_15 dim 1 : vector<32x256xbf16>, i32 -> vector<32x256xbf16>
    %cst_16 = arith.constant -3.004060e+38 : bf16
    %61 = vector.shape_cast %37 : vector<1x256xi1> to vector<1x256xi1>
    %62 = vector.broadcast %61 : vector<1x256xi1> to vector<32x256xi1>
    %63 = vector.broadcast %cst_16 : bf16 to vector<32x256xbf16>
    %64 = arith.select %62, %60, %63 : vector<32x256xi1>, vector<32x256xbf16>
    %65 = arith.maximumf %59, %64 : vector<32x256xbf16>
    %c2_i32_17 = arith.constant 2 : i32
    %66 = tpu.dynamic_rotate %14 by %c2_i32_17 dim 1 : vector<32x256xbf16>, i32 -> vector<32x256xbf16>
    %cst_18 = arith.constant -3.004060e+38 : bf16
    %67 = vector.shape_cast %39 : vector<1x256xi1> to vector<1x256xi1>
    %68 = vector.broadcast %67 : vector<1x256xi1> to vector<32x256xi1>
    %69 = vector.broadcast %cst_18 : bf16 to vector<32x256xbf16>
    %70 = arith.select %68, %66, %69 : vector<32x256xi1>, vector<32x256xbf16>
    %71 = arith.maximumf %65, %70 : vector<32x256xbf16>
    %c240_i32_19 = arith.constant 240 : i32
    %72 = tpu.dynamic_rotate %71 by %c240_i32_19 dim 1 : vector<32x256xbf16>, i32 -> vector<32x256xbf16>
    %cst_20 = arith.constant -3.004060e+38 : bf16
    %73 = vector.shape_cast %41 : vector<1x256xi1> to vector<1x256xi1>
    %74 = vector.broadcast %73 : vector<1x256xi1> to vector<32x256xi1>
    %75 = vector.broadcast %cst_20 : bf16 to vector<32x256xbf16>
    %76 = arith.select %74, %72, %75 : vector<32x256xi1>, vector<32x256xbf16>
    %77 = arith.maximumf %71, %76 : vector<32x256xbf16>
    %c224_i32_21 = arith.constant 224 : i32
    %78 = tpu.dynamic_rotate %71 by %c224_i32_21 dim 1 : vector<32x256xbf16>, i32 -> vector<32x256xbf16>
    %cst_22 = arith.constant -3.004060e+38 : bf16
    %79 = vector.shape_cast %43 : vector<1x256xi1> to vector<1x256xi1>
    %80 = vector.broadcast %79 : vector<1x256xi1> to vector<32x256xi1>
    %81 = vector.broadcast %cst_22 : bf16 to vector<32x256xbf16>
    %82 = arith.select %80, %78, %81 : vector<32x256xi1>, vector<32x256xbf16>
    %83 = arith.maximumf %77, %82 : vector<32x256xbf16>
    %c16_i32_23 = arith.constant 16 : i32
    %84 = tpu.dynamic_rotate %71 by %c16_i32_23 dim 1 : vector<32x256xbf16>, i32 -> vector<32x256xbf16>
    %cst_24 = arith.constant -3.004060e+38 : bf16
    %85 = vector.shape_cast %45 : vector<1x256xi1> to vector<1x256xi1>
    %86 = vector.broadcast %85 : vector<1x256xi1> to vector<32x256xi1>
    %87 = vector.broadcast %cst_24 : bf16 to vector<32x256xbf16>
    %88 = arith.select %86, %84, %87 : vector<32x256xi1>, vector<32x256xbf16>
    %89 = arith.maximumf %83, %88 : vector<32x256xbf16>
    %c32_i32_25 = arith.constant 32 : i32
    %90 = tpu.dynamic_rotate %71 by %c32_i32_25 dim 1 : vector<32x256xbf16>, i32 -> vector<32x256xbf16>
    %cst_26 = arith.constant -3.004060e+38 : bf16
    %91 = vector.shape_cast %47 : vector<1x256xi1> to vector<1x256xi1>
    %92 = vector.broadcast %91 : vector<1x256xi1> to vector<32x256xi1>
    %93 = vector.broadcast %cst_26 : bf16 to vector<32x256xbf16>
    %94 = arith.select %92, %90, %93 : vector<32x256xi1>, vector<32x256xbf16>
    %95 = arith.maximumf %89, %94 : vector<32x256xbf16>
    %c255_i32_27 = arith.constant 255 : i32
    %96 = tpu.dynamic_rotate %95 by %c255_i32_27 dim 1 : vector<32x256xbf16>, i32 -> vector<32x256xbf16>
    %cst_28 = arith.constant -3.004060e+38 : bf16
    %97 = vector.shape_cast %33 : vector<1x256xi1> to vector<1x256xi1>
    %98 = vector.broadcast %97 : vector<1x256xi1> to vector<32x256xi1>
    %99 = vector.broadcast %cst_28 : bf16 to vector<32x256xbf16>
    %100 = arith.select %98, %96, %99 : vector<32x256xi1>, vector<32x256xbf16>
    %101 = arith.maximumf %95, %100 : vector<32x256xbf16>
    %c254_i32_29 = arith.constant 254 : i32
    %102 = tpu.dynamic_rotate %95 by %c254_i32_29 dim 1 : vector<32x256xbf16>, i32 -> vector<32x256xbf16>
    %cst_30 = arith.constant -3.004060e+38 : bf16
    %103 = vector.shape_cast %35 : vector<1x256xi1> to vector<1x256xi1>
    %104 = vector.broadcast %103 : vector<1x256xi1> to vector<32x256xi1>
    %105 = vector.broadcast %cst_30 : bf16 to vector<32x256xbf16>
    %106 = arith.select %104, %102, %105 : vector<32x256xi1>, vector<32x256xbf16>
    %107 = arith.maximumf %101, %106 : vector<32x256xbf16>
    %c1_i32_31 = arith.constant 1 : i32
    %108 = tpu.dynamic_rotate %95 by %c1_i32_31 dim 1 : vector<32x256xbf16>, i32 -> vector<32x256xbf16>
    %cst_32 = arith.constant -3.004060e+38 : bf16
    %109 = vector.shape_cast %37 : vector<1x256xi1> to vector<1x256xi1>
    %110 = vector.broadcast %109 : vector<1x256xi1> to vector<32x256xi1>
    %111 = vector.broadcast %cst_32 : bf16 to vector<32x256xbf16>
    %112 = arith.select %110, %108, %111 : vector<32x256xi1>, vector<32x256xbf16>
    %113 = arith.maximumf %107, %112 : vector<32x256xbf16>
    %c2_i32_33 = arith.constant 2 : i32
    %114 = tpu.dynamic_rotate %95 by %c2_i32_33 dim 1 : vector<32x256xbf16>, i32 -> vector<32x256xbf16>
    %cst_34 = arith.constant -3.004060e+38 : bf16
    %115 = vector.shape_cast %39 : vector<1x256xi1> to vector<1x256xi1>
    %116 = vector.broadcast %115 : vector<1x256xi1> to vector<32x256xi1>
    %117 = vector.broadcast %cst_34 : bf16 to vector<32x256xbf16>
    %118 = arith.select %116, %114, %117 : vector<32x256xi1>, vector<32x256xbf16>
    %119 = arith.maximumf %113, %118 : vector<32x256xbf16>
    %c240_i32_35 = arith.constant 240 : i32
    %120 = tpu.dynamic_rotate %119 by %c240_i32_35 dim 1 : vector<32x256xbf16>, i32 -> vector<32x256xbf16>
    %cst_36 = arith.constant -3.004060e+38 : bf16
    %121 = vector.shape_cast %41 : vector<1x256xi1> to vector<1x256xi1>
    %122 = vector.broadcast %121 : vector<1x256xi1> to vector<32x256xi1>
    %123 = vector.broadcast %cst_36 : bf16 to vector<32x256xbf16>
    %124 = arith.select %122, %120, %123 : vector<32x256xi1>, vector<32x256xbf16>
    %125 = arith.maximumf %119, %124 : vector<32x256xbf16>
    %c224_i32_37 = arith.constant 224 : i32
    %126 = tpu.dynamic_rotate %119 by %c224_i32_37 dim 1 : vector<32x256xbf16>, i32 -> vector<32x256xbf16>
    %cst_38 = arith.constant -3.004060e+38 : bf16
    %127 = vector.shape_cast %43 : vector<1x256xi1> to vector<1x256xi1>
    %128 = vector.broadcast %127 : vector<1x256xi1> to vector<32x256xi1>
    %129 = vector.broadcast %cst_38 : bf16 to vector<32x256xbf16>
    %130 = arith.select %128, %126, %129 : vector<32x256xi1>, vector<32x256xbf16>
    %131 = arith.maximumf %125, %130 : vector<32x256xbf16>
    %c16_i32_39 = arith.constant 16 : i32
    %132 = tpu.dynamic_rotate %119 by %c16_i32_39 dim 1 : vector<32x256xbf16>, i32 -> vector<32x256xbf16>
    %cst_40 = arith.constant -3.004060e+38 : bf16
    %133 = vector.shape_cast %45 : vector<1x256xi1> to vector<1x256xi1>
    %134 = vector.broadcast %133 : vector<1x256xi1> to vector<32x256xi1>
    %135 = vector.broadcast %cst_40 : bf16 to vector<32x256xbf16>
    %136 = arith.select %134, %132, %135 : vector<32x256xi1>, vector<32x256xbf16>
    %137 = arith.maximumf %131, %136 : vector<32x256xbf16>
    %c32_i32_41 = arith.constant 32 : i32
    %138 = tpu.dynamic_rotate %119 by %c32_i32_41 dim 1 : vector<32x256xbf16>, i32 -> vector<32x256xbf16>
    %cst_42 = arith.constant -3.004060e+38 : bf16
    %139 = vector.shape_cast %47 : vector<1x256xi1> to vector<1x256xi1>
    %140 = vector.broadcast %139 : vector<1x256xi1> to vector<32x256xi1>
    %141 = vector.broadcast %cst_42 : bf16 to vector<32x256xbf16>
    %142 = arith.select %140, %138, %141 : vector<32x256xi1>, vector<32x256xbf16>
    %143 = arith.maximumf %137, %142 : vector<32x256xbf16>
    %c255_i32_43 = arith.constant 255 : i32
    %144 = tpu.dynamic_rotate %143 by %c255_i32_43 dim 1 : vector<32x256xbf16>, i32 -> vector<32x256xbf16>
    %cst_44 = arith.constant -3.004060e+38 : bf16
    %145 = vector.shape_cast %33 : vector<1x256xi1> to vector<1x256xi1>
    %146 = vector.broadcast %145 : vector<1x256xi1> to vector<32x256xi1>
    %147 = vector.broadcast %cst_44 : bf16 to vector<32x256xbf16>
    %148 = arith.select %146, %144, %147 : vector<32x256xi1>, vector<32x256xbf16>
    %149 = arith.maximumf %143, %148 : vector<32x256xbf16>
    %c254_i32_45 = arith.constant 254 : i32
    %150 = tpu.dynamic_rotate %143 by %c254_i32_45 dim 1 : vector<32x256xbf16>, i32 -> vector<32x256xbf16>
    %cst_46 = arith.constant -3.004060e+38 : bf16
    %151 = vector.shape_cast %35 : vector<1x256xi1> to vector<1x256xi1>
    %152 = vector.broadcast %151 : vector<1x256xi1> to vector<32x256xi1>
    %153 = vector.broadcast %cst_46 : bf16 to vector<32x256xbf16>
    %154 = arith.select %152, %150, %153 : vector<32x256xi1>, vector<32x256xbf16>
    %155 = arith.maximumf %149, %154 : vector<32x256xbf16>
    %c1_i32_47 = arith.constant 1 : i32
    %156 = tpu.dynamic_rotate %143 by %c1_i32_47 dim 1 : vector<32x256xbf16>, i32 -> vector<32x256xbf16>
    %cst_48 = arith.constant -3.004060e+38 : bf16
    %157 = vector.shape_cast %37 : vector<1x256xi1> to vector<1x256xi1>
    %158 = vector.broadcast %157 : vector<1x256xi1> to vector<32x256xi1>
    %159 = vector.broadcast %cst_48 : bf16 to vector<32x256xbf16>
    %160 = arith.select %158, %156, %159 : vector<32x256xi1>, vector<32x256xbf16>
    %161 = arith.maximumf %155, %160 : vector<32x256xbf16>
    %c2_i32_49 = arith.constant 2 : i32
    %162 = tpu.dynamic_rotate %143 by %c2_i32_49 dim 1 : vector<32x256xbf16>, i32 -> vector<32x256xbf16>
    %cst_50 = arith.constant -3.004060e+38 : bf16
    %163 = vector.shape_cast %39 : vector<1x256xi1> to vector<1x256xi1>
    %164 = vector.broadcast %163 : vector<1x256xi1> to vector<32x256xi1>
    %165 = vector.broadcast %cst_50 : bf16 to vector<32x256xbf16>
    %166 = arith.select %164, %162, %165 : vector<32x256xi1>, vector<32x256xbf16>
    %167 = arith.maximumf %161, %166 : vector<32x256xbf16>
    %c240_i32_51 = arith.constant 240 : i32
    %168 = tpu.dynamic_rotate %167 by %c240_i32_51 dim 1 : vector<32x256xbf16>, i32 -> vector<32x256xbf16>
    %cst_52 = arith.constant -3.004060e+38 : bf16
    %169 = vector.shape_cast %41 : vector<1x256xi1> to vector<1x256xi1>
    %170 = vector.broadcast %169 : vector<1x256xi1> to vector<32x256xi1>
    %171 = vector.broadcast %cst_52 : bf16 to vector<32x256xbf16>
    %172 = arith.select %170, %168, %171 : vector<32x256xi1>, vector<32x256xbf16>
    %173 = arith.maximumf %167, %172 : vector<32x256xbf16>
    %c224_i32_53 = arith.constant 224 : i32
    %174 = tpu.dynamic_rotate %167 by %c224_i32_53 dim 1 : vector<32x256xbf16>, i32 -> vector<32x256xbf16>
    %cst_54 = arith.constant -3.004060e+38 : bf16
    %175 = vector.shape_cast %43 : vector<1x256xi1> to vector<1x256xi1>
    %176 = vector.broadcast %175 : vector<1x256xi1> to vector<32x256xi1>
    %177 = vector.broadcast %cst_54 : bf16 to vector<32x256xbf16>
    %178 = arith.select %176, %174, %177 : vector<32x256xi1>, vector<32x256xbf16>
    %179 = arith.maximumf %173, %178 : vector<32x256xbf16>
    %c16_i32_55 = arith.constant 16 : i32
    %180 = tpu.dynamic_rotate %167 by %c16_i32_55 dim 1 : vector<32x256xbf16>, i32 -> vector<32x256xbf16>
    %cst_56 = arith.constant -3.004060e+38 : bf16
    %181 = vector.shape_cast %45 : vector<1x256xi1> to vector<1x256xi1>
    %182 = vector.broadcast %181 : vector<1x256xi1> to vector<32x256xi1>
    %183 = vector.broadcast %cst_56 : bf16 to vector<32x256xbf16>
    %184 = arith.select %182, %180, %183 : vector<32x256xi1>, vector<32x256xbf16>
    %185 = arith.maximumf %179, %184 : vector<32x256xbf16>
    %c32_i32_57 = arith.constant 32 : i32
    %186 = tpu.dynamic_rotate %167 by %c32_i32_57 dim 1 : vector<32x256xbf16>, i32 -> vector<32x256xbf16>
    %cst_58 = arith.constant -3.004060e+38 : bf16
    %187 = vector.shape_cast %47 : vector<1x256xi1> to vector<1x256xi1>
    %188 = vector.broadcast %187 : vector<1x256xi1> to vector<32x256xi1>
    %189 = vector.broadcast %cst_58 : bf16 to vector<32x256xbf16>
    %190 = arith.select %188, %186, %189 : vector<32x256xi1>, vector<32x256xbf16>
    %191 = arith.maximumf %185, %190 : vector<32x256xbf16>
    %192 = tpu.concatenate %14, %95, %143, %191 in 0 : vector<32x256xbf16>, vector<32x256xbf16>, vector<32x256xbf16>, vector<32x256xbf16> -> vector<128x256xbf16>
    %c0_59 = arith.constant 0 : index
    %c0_60 = arith.constant 0 : index
    %193 = vector.load %arg4[%c0_59, %c0_60] : memref<64x128xbf16, #tpu.memory_space<vmem>>, vector<64x128xbf16>
    %cst_61 = arith.constant dense<0.000000e+00> : vector<64x256xf32>
    %194 = tpu.matmul %193, %192, %cst_61 {dimension_numbers = #tpu.dot_dimension_numbers<[1], [0], [0], [1], [0, 0, 1, 1], [], []>} : vector<64x128xbf16>, vector<128x256xbf16>, vector<64x256xf32> -> vector<64x256xf32>
    %c0_62 = arith.constant 0 : index
    %c0_63 = arith.constant 0 : index
    %195 = vector.load %arg5[%c0_62, %c0_63] : memref<64x1xf32, #tpu.memory_space<vmem>>, vector<64x1xf32>
    %196 = vector.broadcast %195 : vector<64x1xf32> to vector<64x256xf32>
    %197 = arith.addf %194, %196 : vector<64x256xf32>
    %cst_64 = arith.constant 0.000000e+00 : f32
    %198 = vector.broadcast %cst_64 : f32 to vector<64x256xf32>
    %199 = arith.subf %198, %197 : vector<64x256xf32>
    %200 = math.exp %199 : vector<64x256xf32>
    %cst_65 = arith.constant 1.000000e+00 : f32
    %201 = vector.broadcast %cst_65 : f32 to vector<64x256xf32>
    %202 = arith.addf %201, %200 : vector<64x256xf32>
    %203 = tpu.reciprocal %202 {approx = true} : vector<64x256xf32> -> vector<64x256xf32>
    %204 = arith.mulf %197, %203 : vector<64x256xf32>
    %c0_66 = arith.constant 0 : index
    %c0_67 = arith.constant 0 : index
    %c0_68 = arith.constant 0 : index
    %205 = vector.load %arg6[%c0_66, %c0_67, %c0_68] : memref<1x64x256xf32, #tpu.memory_space<vmem>>, vector<1x64x256xf32>
    %206 = vector.shape_cast %205 : vector<1x64x256xf32> to vector<64x256xf32>
    %207 = vector.shape_cast %204 : vector<64x256xf32> to vector<1x64x256xf32>
    tpu.vector_store %arg6[%c0_66, %c0_67, %c0_68], %207 {strides = array<i32>} : memref<1x64x256xf32, #tpu.memory_space<vmem>>, vector<1x64x256xf32>,
    return
  }
  func.func @transform_0(%arg0: i32) -> (i32, i32, i32) {
    %c0_i32 = arith.constant 0 : i32
    %c0_i32_0 = arith.constant 0 : i32
    %c0_i32_1 = arith.constant 0 : i32
    return %arg0, %c0_i32, %c0_i32_0 : i32, i32, i32
  }
  func.func @transform_1(%arg0: i32) -> (i32, i32) {
    %c0_i32 = arith.constant 0 : i32
    %c0_i32_0 = arith.constant 0 : i32
    %c0_i32_1 = arith.constant 0 : i32
    return %c0_i32, %c0_i32_0 : i32, i32
  }
  func.func @transform_2(%arg0: i32) -> (i32, i32) {
    %c0_i32 = arith.constant 0 : i32
    %c0_i32_0 = arith.constant 0 : i32
    %c0_i32_1 = arith.constant 0 : i32
    return %c0_i32, %c0_i32_0 : i32, i32
  }
  func.func @transform_3(%arg0: i32) -> (i32, i32) {
    %c0_i32 = arith.constant 0 : i32
    %c0_i32_0 = arith.constant 0 : i32
    %c0_i32_1 = arith.constant 0 : i32
    return %c0_i32, %c0_i32_0 : i32, i32
  }
  func.func @transform_4(%arg0: i32) -> (i32, i32) {
    %c0_i32 = arith.constant 0 : i32
    %c0_i32_0 = arith.constant 0 : i32
    %c0_i32_1 = arith.constant 0 : i32
    return %c0_i32, %c0_i32_0 : i32, i32
  }
  func.func @transform_5(%arg0: i32) -> (i32, i32, i32) {
    %c0_i32 = arith.constant 0 : i32
    %c0_i32_0 = arith.constant 0 : i32
    %c0_i32_1 = arith.constant 0 : i32
    return %arg0, %c0_i32, %c0_i32_0 : i32, i32, i32
  }
}

module attributes {stable_mosaic.version = 11 : i64} {
  func.func @_sppf_kernel(%arg0: i32, %arg1: memref<1x64x256xbf16, #tpu.memory_space<vmem>>, %arg2: memref<32x64xbf16, #tpu.memory_space<vmem>>, %arg3: memref<32x1xf32, #tpu.memory_space<vmem>>, %arg4: memref<64x128xbf16, #tpu.memory_space<vmem>>, %arg5: memref<64x1xf32, #tpu.memory_space<vmem>>, %arg6: memref<1x64x256xf32, #tpu.memory_space<vmem>>) attributes {dimension_semantics = [#tpu.dimension_semantics<parallel>], iteration_bounds = array<i64: 2>, scalar_prefetch = 0 : i64, scratch_operands = 0 : i64, tpu.core_type = #tpu.core_type<tc>, window_params = [{transform_indices = @transform_0, window_bounds = array<i64: 1, 64, 256>}, {pipeline_mode = #tpu.pipeline_mode<synchronous>, transform_indices = @transform_1, window_bounds = array<i64: 32, 64>}, {pipeline_mode = #tpu.pipeline_mode<synchronous>, transform_indices = @transform_2, window_bounds = array<i64: 32, 1>}, {pipeline_mode = #tpu.pipeline_mode<synchronous>, transform_indices = @transform_3, window_bounds = array<i64: 64, 128>}, {pipeline_mode = #tpu.pipeline_mode<synchronous>, transform_indices = @transform_4, window_bounds = array<i64: 64, 1>}, {transform_indices = @transform_5, window_bounds = array<i64: 1, 64, 256>}]} {
    %c0 = arith.constant 0 : index
    %c0_0 = arith.constant 0 : index
    %0 = vector.load %arg2[%c0, %c0_0] : memref<32x64xbf16, #tpu.memory_space<vmem>>, vector<32x64xbf16>
    %c0_1 = arith.constant 0 : index
    %c0_2 = arith.constant 0 : index
    %c0_3 = arith.constant 0 : index
    %1 = vector.load %arg1[%c0_1, %c0_2, %c0_3] : memref<1x64x256xbf16, #tpu.memory_space<vmem>>, vector<1x64x256xbf16>
    %2 = vector.shape_cast %1 : vector<1x64x256xbf16> to vector<64x256xbf16>
    %cst = arith.constant dense<0.000000e+00> : vector<32x256xf32>
    %3 = tpu.matmul %0, %2, %cst {dimension_numbers = #tpu.dot_dimension_numbers<[1], [0], [0], [1], [0, 0, 1, 1], [], []>} : vector<32x64xbf16>, vector<64x256xbf16>, vector<32x256xf32> -> vector<32x256xf32>
    %c0_4 = arith.constant 0 : index
    %c0_5 = arith.constant 0 : index
    %4 = vector.load %arg3[%c0_4, %c0_5] : memref<32x1xf32, #tpu.memory_space<vmem>>, vector<32x1xf32>
    %5 = vector.broadcast %4 : vector<32x1xf32> to vector<32x256xf32>
    %6 = arith.addf %3, %5 : vector<32x256xf32>
    %cst_6 = arith.constant 0.000000e+00 : f32
    %7 = vector.broadcast %cst_6 : f32 to vector<32x256xf32>
    %8 = arith.subf %7, %6 : vector<32x256xf32>
    %9 = math.exp %8 : vector<32x256xf32>
    %cst_7 = arith.constant 1.000000e+00 : f32
    %10 = vector.broadcast %cst_7 : f32 to vector<32x256xf32>
    %11 = arith.addf %10, %9 : vector<32x256xf32>
    %12 = tpu.reciprocal %11 {approx = true} : vector<32x256xf32> -> vector<32x256xf32>
    %13 = arith.mulf %6, %12 : vector<32x256xf32>
    %14 = tpu.iota {dimensions = array<i32: 1>} : vector<1x256xi32>
    %c16_i32 = arith.constant 16 : i32
    %c0_i32 = arith.constant 0 : i32
    %15 = arith.cmpi eq, %c16_i32, %c0_i32 : i32
    %c1_i32 = arith.constant 1 : i32
    %16 = arith.select %15, %c1_i32, %c16_i32 : i32
    %17 = vector.broadcast %16 : i32 to vector<1x256xi32>
    %18 = arith.remsi %14, %17 : vector<1x256xi32>
    %c0_i32_8 = arith.constant 0 : i32
    %19 = vector.broadcast %c0_i32_8 : i32 to vector<1x256xi32>
    %20 = arith.cmpi ne, %18, %19 : vector<1x256xi32>
    %c0_i32_9 = arith.constant 0 : i32
    %21 = vector.broadcast %c0_i32_9 : i32 to vector<1x256xi32>
    %22 = arith.cmpi slt, %18, %21 : vector<1x256xi32>
    %c0_i32_10 = arith.constant 0 : i32
    %23 = arith.cmpi slt, %16, %c0_i32_10 : i32
    %24 = vector.broadcast %23 : i1 to vector<1x256xi1>
    %25 = vector.broadcast %24 : vector<1x256xi1> to vector<1x256xi1>
    %26 = arith.xori %22, %25 : vector<1x256xi1>
    %27 = arith.andi %26, %20 : vector<1x256xi1>
    %28 = vector.broadcast %16 : i32 to vector<1x256xi32>
    %29 = arith.addi %18, %28 : vector<1x256xi32>
    %30 = arith.select %27, %29, %18 : vector<1x256xi1>, vector<1x256xi32>
    %c15_i32 = arith.constant 15 : i32
    %31 = vector.broadcast %c15_i32 : i32 to vector<1x256xi32>
    %32 = arith.cmpi slt, %30, %31 : vector<1x256xi32>
    %c14_i32 = arith.constant 14 : i32
    %33 = vector.broadcast %c14_i32 : i32 to vector<1x256xi32>
    %34 = arith.cmpi slt, %30, %33 : vector<1x256xi32>
    %c1_i32_11 = arith.constant 1 : i32
    %35 = vector.broadcast %c1_i32_11 : i32 to vector<1x256xi32>
    %36 = arith.cmpi sge, %30, %35 : vector<1x256xi32>
    %c2_i32 = arith.constant 2 : i32
    %37 = vector.broadcast %c2_i32 : i32 to vector<1x256xi32>
    %38 = arith.cmpi sge, %30, %37 : vector<1x256xi32>
    %c240_i32 = arith.constant 240 : i32
    %39 = vector.broadcast %c240_i32 : i32 to vector<1x256xi32>
    %40 = arith.cmpi slt, %14, %39 : vector<1x256xi32>
    %c224_i32 = arith.constant 224 : i32
    %41 = vector.broadcast %c224_i32 : i32 to vector<1x256xi32>
    %42 = arith.cmpi slt, %14, %41 : vector<1x256xi32>
    %c16_i32_12 = arith.constant 16 : i32
    %43 = vector.broadcast %c16_i32_12 : i32 to vector<1x256xi32>
    %44 = arith.cmpi sge, %14, %43 : vector<1x256xi32>
    %c32_i32 = arith.constant 32 : i32
    %45 = vector.broadcast %c32_i32 : i32 to vector<1x256xi32>
    %46 = arith.cmpi sge, %14, %45 : vector<1x256xi32>
    %c255_i32 = arith.constant 255 : i32
    %47 = tpu.dynamic_rotate %13 by %c255_i32 dim 1 : vector<32x256xf32>, i32 -> vector<32x256xf32>
    %cst_13 = arith.constant -3.000000e+38 : f32
    %48 = vector.shape_cast %32 : vector<1x256xi1> to vector<1x256xi1>
    %49 = vector.broadcast %48 : vector<1x256xi1> to vector<32x256xi1>
    %50 = vector.broadcast %cst_13 : f32 to vector<32x256xf32>
    %51 = arith.select %49, %47, %50 : vector<32x256xi1>, vector<32x256xf32>
    %52 = arith.maximumf %13, %51 : vector<32x256xf32>
    %c254_i32 = arith.constant 254 : i32
    %53 = tpu.dynamic_rotate %13 by %c254_i32 dim 1 : vector<32x256xf32>, i32 -> vector<32x256xf32>
    %cst_14 = arith.constant -3.000000e+38 : f32
    %54 = vector.shape_cast %34 : vector<1x256xi1> to vector<1x256xi1>
    %55 = vector.broadcast %54 : vector<1x256xi1> to vector<32x256xi1>
    %56 = vector.broadcast %cst_14 : f32 to vector<32x256xf32>
    %57 = arith.select %55, %53, %56 : vector<32x256xi1>, vector<32x256xf32>
    %58 = arith.maximumf %52, %57 : vector<32x256xf32>
    %c1_i32_15 = arith.constant 1 : i32
    %59 = tpu.dynamic_rotate %13 by %c1_i32_15 dim 1 : vector<32x256xf32>, i32 -> vector<32x256xf32>
    %cst_16 = arith.constant -3.000000e+38 : f32
    %60 = vector.shape_cast %36 : vector<1x256xi1> to vector<1x256xi1>
    %61 = vector.broadcast %60 : vector<1x256xi1> to vector<32x256xi1>
    %62 = vector.broadcast %cst_16 : f32 to vector<32x256xf32>
    %63 = arith.select %61, %59, %62 : vector<32x256xi1>, vector<32x256xf32>
    %64 = arith.maximumf %58, %63 : vector<32x256xf32>
    %c2_i32_17 = arith.constant 2 : i32
    %65 = tpu.dynamic_rotate %13 by %c2_i32_17 dim 1 : vector<32x256xf32>, i32 -> vector<32x256xf32>
    %cst_18 = arith.constant -3.000000e+38 : f32
    %66 = vector.shape_cast %38 : vector<1x256xi1> to vector<1x256xi1>
    %67 = vector.broadcast %66 : vector<1x256xi1> to vector<32x256xi1>
    %68 = vector.broadcast %cst_18 : f32 to vector<32x256xf32>
    %69 = arith.select %67, %65, %68 : vector<32x256xi1>, vector<32x256xf32>
    %70 = arith.maximumf %64, %69 : vector<32x256xf32>
    %c240_i32_19 = arith.constant 240 : i32
    %71 = tpu.dynamic_rotate %70 by %c240_i32_19 dim 1 : vector<32x256xf32>, i32 -> vector<32x256xf32>
    %cst_20 = arith.constant -3.000000e+38 : f32
    %72 = vector.shape_cast %40 : vector<1x256xi1> to vector<1x256xi1>
    %73 = vector.broadcast %72 : vector<1x256xi1> to vector<32x256xi1>
    %74 = vector.broadcast %cst_20 : f32 to vector<32x256xf32>
    %75 = arith.select %73, %71, %74 : vector<32x256xi1>, vector<32x256xf32>
    %76 = arith.maximumf %70, %75 : vector<32x256xf32>
    %c224_i32_21 = arith.constant 224 : i32
    %77 = tpu.dynamic_rotate %70 by %c224_i32_21 dim 1 : vector<32x256xf32>, i32 -> vector<32x256xf32>
    %cst_22 = arith.constant -3.000000e+38 : f32
    %78 = vector.shape_cast %42 : vector<1x256xi1> to vector<1x256xi1>
    %79 = vector.broadcast %78 : vector<1x256xi1> to vector<32x256xi1>
    %80 = vector.broadcast %cst_22 : f32 to vector<32x256xf32>
    %81 = arith.select %79, %77, %80 : vector<32x256xi1>, vector<32x256xf32>
    %82 = arith.maximumf %76, %81 : vector<32x256xf32>
    %c16_i32_23 = arith.constant 16 : i32
    %83 = tpu.dynamic_rotate %70 by %c16_i32_23 dim 1 : vector<32x256xf32>, i32 -> vector<32x256xf32>
    %cst_24 = arith.constant -3.000000e+38 : f32
    %84 = vector.shape_cast %44 : vector<1x256xi1> to vector<1x256xi1>
    %85 = vector.broadcast %84 : vector<1x256xi1> to vector<32x256xi1>
    %86 = vector.broadcast %cst_24 : f32 to vector<32x256xf32>
    %87 = arith.select %85, %83, %86 : vector<32x256xi1>, vector<32x256xf32>
    %88 = arith.maximumf %82, %87 : vector<32x256xf32>
    %c32_i32_25 = arith.constant 32 : i32
    %89 = tpu.dynamic_rotate %70 by %c32_i32_25 dim 1 : vector<32x256xf32>, i32 -> vector<32x256xf32>
    %cst_26 = arith.constant -3.000000e+38 : f32
    %90 = vector.shape_cast %46 : vector<1x256xi1> to vector<1x256xi1>
    %91 = vector.broadcast %90 : vector<1x256xi1> to vector<32x256xi1>
    %92 = vector.broadcast %cst_26 : f32 to vector<32x256xf32>
    %93 = arith.select %91, %89, %92 : vector<32x256xi1>, vector<32x256xf32>
    %94 = arith.maximumf %88, %93 : vector<32x256xf32>
    %c255_i32_27 = arith.constant 255 : i32
    %95 = tpu.dynamic_rotate %94 by %c255_i32_27 dim 1 : vector<32x256xf32>, i32 -> vector<32x256xf32>
    %cst_28 = arith.constant -3.000000e+38 : f32
    %96 = vector.shape_cast %32 : vector<1x256xi1> to vector<1x256xi1>
    %97 = vector.broadcast %96 : vector<1x256xi1> to vector<32x256xi1>
    %98 = vector.broadcast %cst_28 : f32 to vector<32x256xf32>
    %99 = arith.select %97, %95, %98 : vector<32x256xi1>, vector<32x256xf32>
    %100 = arith.maximumf %94, %99 : vector<32x256xf32>
    %c254_i32_29 = arith.constant 254 : i32
    %101 = tpu.dynamic_rotate %94 by %c254_i32_29 dim 1 : vector<32x256xf32>, i32 -> vector<32x256xf32>
    %cst_30 = arith.constant -3.000000e+38 : f32
    %102 = vector.shape_cast %34 : vector<1x256xi1> to vector<1x256xi1>
    %103 = vector.broadcast %102 : vector<1x256xi1> to vector<32x256xi1>
    %104 = vector.broadcast %cst_30 : f32 to vector<32x256xf32>
    %105 = arith.select %103, %101, %104 : vector<32x256xi1>, vector<32x256xf32>
    %106 = arith.maximumf %100, %105 : vector<32x256xf32>
    %c1_i32_31 = arith.constant 1 : i32
    %107 = tpu.dynamic_rotate %94 by %c1_i32_31 dim 1 : vector<32x256xf32>, i32 -> vector<32x256xf32>
    %cst_32 = arith.constant -3.000000e+38 : f32
    %108 = vector.shape_cast %36 : vector<1x256xi1> to vector<1x256xi1>
    %109 = vector.broadcast %108 : vector<1x256xi1> to vector<32x256xi1>
    %110 = vector.broadcast %cst_32 : f32 to vector<32x256xf32>
    %111 = arith.select %109, %107, %110 : vector<32x256xi1>, vector<32x256xf32>
    %112 = arith.maximumf %106, %111 : vector<32x256xf32>
    %c2_i32_33 = arith.constant 2 : i32
    %113 = tpu.dynamic_rotate %94 by %c2_i32_33 dim 1 : vector<32x256xf32>, i32 -> vector<32x256xf32>
    %cst_34 = arith.constant -3.000000e+38 : f32
    %114 = vector.shape_cast %38 : vector<1x256xi1> to vector<1x256xi1>
    %115 = vector.broadcast %114 : vector<1x256xi1> to vector<32x256xi1>
    %116 = vector.broadcast %cst_34 : f32 to vector<32x256xf32>
    %117 = arith.select %115, %113, %116 : vector<32x256xi1>, vector<32x256xf32>
    %118 = arith.maximumf %112, %117 : vector<32x256xf32>
    %c240_i32_35 = arith.constant 240 : i32
    %119 = tpu.dynamic_rotate %118 by %c240_i32_35 dim 1 : vector<32x256xf32>, i32 -> vector<32x256xf32>
    %cst_36 = arith.constant -3.000000e+38 : f32
    %120 = vector.shape_cast %40 : vector<1x256xi1> to vector<1x256xi1>
    %121 = vector.broadcast %120 : vector<1x256xi1> to vector<32x256xi1>
    %122 = vector.broadcast %cst_36 : f32 to vector<32x256xf32>
    %123 = arith.select %121, %119, %122 : vector<32x256xi1>, vector<32x256xf32>
    %124 = arith.maximumf %118, %123 : vector<32x256xf32>
    %c224_i32_37 = arith.constant 224 : i32
    %125 = tpu.dynamic_rotate %118 by %c224_i32_37 dim 1 : vector<32x256xf32>, i32 -> vector<32x256xf32>
    %cst_38 = arith.constant -3.000000e+38 : f32
    %126 = vector.shape_cast %42 : vector<1x256xi1> to vector<1x256xi1>
    %127 = vector.broadcast %126 : vector<1x256xi1> to vector<32x256xi1>
    %128 = vector.broadcast %cst_38 : f32 to vector<32x256xf32>
    %129 = arith.select %127, %125, %128 : vector<32x256xi1>, vector<32x256xf32>
    %130 = arith.maximumf %124, %129 : vector<32x256xf32>
    %c16_i32_39 = arith.constant 16 : i32
    %131 = tpu.dynamic_rotate %118 by %c16_i32_39 dim 1 : vector<32x256xf32>, i32 -> vector<32x256xf32>
    %cst_40 = arith.constant -3.000000e+38 : f32
    %132 = vector.shape_cast %44 : vector<1x256xi1> to vector<1x256xi1>
    %133 = vector.broadcast %132 : vector<1x256xi1> to vector<32x256xi1>
    %134 = vector.broadcast %cst_40 : f32 to vector<32x256xf32>
    %135 = arith.select %133, %131, %134 : vector<32x256xi1>, vector<32x256xf32>
    %136 = arith.maximumf %130, %135 : vector<32x256xf32>
    %c32_i32_41 = arith.constant 32 : i32
    %137 = tpu.dynamic_rotate %118 by %c32_i32_41 dim 1 : vector<32x256xf32>, i32 -> vector<32x256xf32>
    %cst_42 = arith.constant -3.000000e+38 : f32
    %138 = vector.shape_cast %46 : vector<1x256xi1> to vector<1x256xi1>
    %139 = vector.broadcast %138 : vector<1x256xi1> to vector<32x256xi1>
    %140 = vector.broadcast %cst_42 : f32 to vector<32x256xf32>
    %141 = arith.select %139, %137, %140 : vector<32x256xi1>, vector<32x256xf32>
    %142 = arith.maximumf %136, %141 : vector<32x256xf32>
    %c255_i32_43 = arith.constant 255 : i32
    %143 = tpu.dynamic_rotate %142 by %c255_i32_43 dim 1 : vector<32x256xf32>, i32 -> vector<32x256xf32>
    %cst_44 = arith.constant -3.000000e+38 : f32
    %144 = vector.shape_cast %32 : vector<1x256xi1> to vector<1x256xi1>
    %145 = vector.broadcast %144 : vector<1x256xi1> to vector<32x256xi1>
    %146 = vector.broadcast %cst_44 : f32 to vector<32x256xf32>
    %147 = arith.select %145, %143, %146 : vector<32x256xi1>, vector<32x256xf32>
    %148 = arith.maximumf %142, %147 : vector<32x256xf32>
    %c254_i32_45 = arith.constant 254 : i32
    %149 = tpu.dynamic_rotate %142 by %c254_i32_45 dim 1 : vector<32x256xf32>, i32 -> vector<32x256xf32>
    %cst_46 = arith.constant -3.000000e+38 : f32
    %150 = vector.shape_cast %34 : vector<1x256xi1> to vector<1x256xi1>
    %151 = vector.broadcast %150 : vector<1x256xi1> to vector<32x256xi1>
    %152 = vector.broadcast %cst_46 : f32 to vector<32x256xf32>
    %153 = arith.select %151, %149, %152 : vector<32x256xi1>, vector<32x256xf32>
    %154 = arith.maximumf %148, %153 : vector<32x256xf32>
    %c1_i32_47 = arith.constant 1 : i32
    %155 = tpu.dynamic_rotate %142 by %c1_i32_47 dim 1 : vector<32x256xf32>, i32 -> vector<32x256xf32>
    %cst_48 = arith.constant -3.000000e+38 : f32
    %156 = vector.shape_cast %36 : vector<1x256xi1> to vector<1x256xi1>
    %157 = vector.broadcast %156 : vector<1x256xi1> to vector<32x256xi1>
    %158 = vector.broadcast %cst_48 : f32 to vector<32x256xf32>
    %159 = arith.select %157, %155, %158 : vector<32x256xi1>, vector<32x256xf32>
    %160 = arith.maximumf %154, %159 : vector<32x256xf32>
    %c2_i32_49 = arith.constant 2 : i32
    %161 = tpu.dynamic_rotate %142 by %c2_i32_49 dim 1 : vector<32x256xf32>, i32 -> vector<32x256xf32>
    %cst_50 = arith.constant -3.000000e+38 : f32
    %162 = vector.shape_cast %38 : vector<1x256xi1> to vector<1x256xi1>
    %163 = vector.broadcast %162 : vector<1x256xi1> to vector<32x256xi1>
    %164 = vector.broadcast %cst_50 : f32 to vector<32x256xf32>
    %165 = arith.select %163, %161, %164 : vector<32x256xi1>, vector<32x256xf32>
    %166 = arith.maximumf %160, %165 : vector<32x256xf32>
    %c240_i32_51 = arith.constant 240 : i32
    %167 = tpu.dynamic_rotate %166 by %c240_i32_51 dim 1 : vector<32x256xf32>, i32 -> vector<32x256xf32>
    %cst_52 = arith.constant -3.000000e+38 : f32
    %168 = vector.shape_cast %40 : vector<1x256xi1> to vector<1x256xi1>
    %169 = vector.broadcast %168 : vector<1x256xi1> to vector<32x256xi1>
    %170 = vector.broadcast %cst_52 : f32 to vector<32x256xf32>
    %171 = arith.select %169, %167, %170 : vector<32x256xi1>, vector<32x256xf32>
    %172 = arith.maximumf %166, %171 : vector<32x256xf32>
    %c224_i32_53 = arith.constant 224 : i32
    %173 = tpu.dynamic_rotate %166 by %c224_i32_53 dim 1 : vector<32x256xf32>, i32 -> vector<32x256xf32>
    %cst_54 = arith.constant -3.000000e+38 : f32
    %174 = vector.shape_cast %42 : vector<1x256xi1> to vector<1x256xi1>
    %175 = vector.broadcast %174 : vector<1x256xi1> to vector<32x256xi1>
    %176 = vector.broadcast %cst_54 : f32 to vector<32x256xf32>
    %177 = arith.select %175, %173, %176 : vector<32x256xi1>, vector<32x256xf32>
    %178 = arith.maximumf %172, %177 : vector<32x256xf32>
    %c16_i32_55 = arith.constant 16 : i32
    %179 = tpu.dynamic_rotate %166 by %c16_i32_55 dim 1 : vector<32x256xf32>, i32 -> vector<32x256xf32>
    %cst_56 = arith.constant -3.000000e+38 : f32
    %180 = vector.shape_cast %44 : vector<1x256xi1> to vector<1x256xi1>
    %181 = vector.broadcast %180 : vector<1x256xi1> to vector<32x256xi1>
    %182 = vector.broadcast %cst_56 : f32 to vector<32x256xf32>
    %183 = arith.select %181, %179, %182 : vector<32x256xi1>, vector<32x256xf32>
    %184 = arith.maximumf %178, %183 : vector<32x256xf32>
    %c32_i32_57 = arith.constant 32 : i32
    %185 = tpu.dynamic_rotate %166 by %c32_i32_57 dim 1 : vector<32x256xf32>, i32 -> vector<32x256xf32>
    %cst_58 = arith.constant -3.000000e+38 : f32
    %186 = vector.shape_cast %46 : vector<1x256xi1> to vector<1x256xi1>
    %187 = vector.broadcast %186 : vector<1x256xi1> to vector<32x256xi1>
    %188 = vector.broadcast %cst_58 : f32 to vector<32x256xf32>
    %189 = arith.select %187, %185, %188 : vector<32x256xi1>, vector<32x256xf32>
    %190 = arith.maximumf %184, %189 : vector<32x256xf32>
    %191 = tpu.concatenate %13, %94, %142, %190 in 0 : vector<32x256xf32>, vector<32x256xf32>, vector<32x256xf32>, vector<32x256xf32> -> vector<128x256xf32>
    %192 = arith.truncf %191 : vector<128x256xf32> to vector<128x256xbf16>
    %c0_59 = arith.constant 0 : index
    %c0_60 = arith.constant 0 : index
    %193 = vector.load %arg4[%c0_59, %c0_60] : memref<64x128xbf16, #tpu.memory_space<vmem>>, vector<64x128xbf16>
    %cst_61 = arith.constant dense<0.000000e+00> : vector<64x256xf32>
    %194 = tpu.matmul %193, %192, %cst_61 {dimension_numbers = #tpu.dot_dimension_numbers<[1], [0], [0], [1], [0, 0, 1, 1], [], []>} : vector<64x128xbf16>, vector<128x256xbf16>, vector<64x256xf32> -> vector<64x256xf32>
    %c0_62 = arith.constant 0 : index
    %c0_63 = arith.constant 0 : index
    %195 = vector.load %arg5[%c0_62, %c0_63] : memref<64x1xf32, #tpu.memory_space<vmem>>, vector<64x1xf32>
    %196 = vector.broadcast %195 : vector<64x1xf32> to vector<64x256xf32>
    %197 = arith.addf %194, %196 : vector<64x256xf32>
    %cst_64 = arith.constant 0.000000e+00 : f32
    %198 = vector.broadcast %cst_64 : f32 to vector<64x256xf32>
    %199 = arith.subf %198, %197 : vector<64x256xf32>
    %200 = math.exp %199 : vector<64x256xf32>
    %cst_65 = arith.constant 1.000000e+00 : f32
    %201 = vector.broadcast %cst_65 : f32 to vector<64x256xf32>
    %202 = arith.addf %201, %200 : vector<64x256xf32>
    %203 = tpu.reciprocal %202 {approx = true} : vector<64x256xf32> -> vector<64x256xf32>
    %204 = arith.mulf %197, %203 : vector<64x256xf32>
    %c0_66 = arith.constant 0 : index
    %c0_67 = arith.constant 0 : index
    %c0_68 = arith.constant 0 : index
    %205 = vector.load %arg6[%c0_66, %c0_67, %c0_68] : memref<1x64x256xf32, #tpu.memory_space<vmem>>, vector<1x64x256xf32>
    %206 = vector.shape_cast %205 : vector<1x64x256xf32> to vector<64x256xf32>
    %207 = vector.shape_cast %204 : vector<64x256xf32> to vector<1x64x256xf32>
    tpu.vector_store %arg6[%c0_66, %c0_67, %c0_68], %207 {strides = array<i32>} : memref<1x64x256xf32, #tpu.memory_space<vmem>>, vector<1x64x256xf32>,
    return
  }
  func.func @transform_0(%arg0: i32) -> (i32, i32, i32) {
    %c0_i32 = arith.constant 0 : i32
    %c0_i32_0 = arith.constant 0 : i32
    %c0_i32_1 = arith.constant 0 : i32
    return %arg0, %c0_i32, %c0_i32_0 : i32, i32, i32
  }
  func.func @transform_1(%arg0: i32) -> (i32, i32) {
    %c0_i32 = arith.constant 0 : i32
    %c0_i32_0 = arith.constant 0 : i32
    %c0_i32_1 = arith.constant 0 : i32
    return %c0_i32, %c0_i32_0 : i32, i32
  }
  func.func @transform_2(%arg0: i32) -> (i32, i32) {
    %c0_i32 = arith.constant 0 : i32
    %c0_i32_0 = arith.constant 0 : i32
    %c0_i32_1 = arith.constant 0 : i32
    return %c0_i32, %c0_i32_0 : i32, i32
  }
  func.func @transform_3(%arg0: i32) -> (i32, i32) {
    %c0_i32 = arith.constant 0 : i32
    %c0_i32_0 = arith.constant 0 : i32
    %c0_i32_1 = arith.constant 0 : i32
    return %c0_i32, %c0_i32_0 : i32, i32
  }
  func.func @transform_4(%arg0: i32) -> (i32, i32) {
    %c0_i32 = arith.constant 0 : i32
    %c0_i32_0 = arith.constant 0 : i32
    %c0_i32_1 = arith.constant 0 : i32
    return %c0_i32, %c0_i32_0 : i32, i32
  }
  func.func @transform_5(%arg0: i32) -> (i32, i32, i32) {
    %c0_i32 = arith.constant 0 : i32
    %c0_i32_0 = arith.constant 0 : i32
    %c0_i32_1 = arith.constant 0 : i32
    return %arg0, %c0_i32, %c0_i32_0 : i32, i32, i32
  }
}

</mosaic_0001>

<llo_original>
// kernel: tpu_custom_call.1
$region0: #{tpu_custom_call.1}
  #allocation0 [shape = 'u32[]', space=smem, size = 0x4, offset = 0x4, fixed_abs, tag = 'smem constant byte address 0x4 - core index']
  #allocation1 [shape = 'u32[144,128]{1,0:T(1,128)}', space=vmem, size = 0x12000, scoped, tag = 'internal scratch']
  %s0 = inlined_call_operand.hbm [shape: bf16[2,64,256], index: 0, kind: input, shape index: {}]
  %s1 = inlined_call_operand.vmem [shape: bf16[32,64], index: 1, kind: input, shape index: {}]
  %s2 = inlined_call_operand.vmem [shape: f32[32,1], index: 2, kind: input, shape index: {}]
  %s3 = inlined_call_operand.vmem [shape: bf16[64,128], index: 3, kind: input, shape index: {}]
  %s4 = inlined_call_operand.vmem [shape: f32[64,1], index: 4, kind: input, shape index: {}]
  %s5 = inlined_call_operand.hbm [shape: f32[2,64,256], index: 5, kind: output, shape index: {}]
  %s6 = sld [smem:[#allocation0]]
  $region57: #{tpu_custom_call.1} parent=0
    _
  %s8 = ssub.s32 1, %s6
  %s9 = scalar_select 0, %s8, %s6
  $region1: #{tpu_custom_call.1} parent=0
    #allocation2 [shape = 'u8[65536]{0}', space=vmem, size = 0x10000, scoped, tag = 'input window, operand 0']
    #allocation3 [shape = 's32[2]{0}', space=sflag, size = 0x8, scoped, tag = 'scoped memory for tpu_custom_call.1']
    #allocation4 [shape = 's32[2]{0}', space=sflag, size = 0x8, scoped, tag = 'scoped memory for tpu_custom_call.1']
    #allocation5 [shape = 'u8[131072]{0}', space=vmem, size = 0x20000, scoped, tag = 'output window, operand 0']
    %10 = vsyncpa [#allocation3], 0
    %s11 = scalar_lea.sflag [#allocation3], 1
    %12 = vsyncpa %s11, 0
    %13 = vsyncpa [#allocation4], 0
    %s14 = scalar_lea.sflag [#allocation4], 1
    %15 = vsyncpa %s14, 0
    loop: start=0, step=1, limit=4
    $region2: #{tpu_custom_call.1} parent=1 // loop_pre_header
      _
    $region3: #{tpu_custom_call.1} parent=1 // loop_header
      %s17 = sphi 0, %s21
      %p18 = scmp.ge.s32.totalorder %s17, 4
      %s27 = sphi 0, %s29
      %s30 = sphi 0, %s27
      %s31 = sphi 0, %s30
      %s47 = sphi 0, %s31
      %s51 = sphi 0, %s51
      %s53 = sphi 0, %s51
      %s54 = sphi 0, %s53
      %s68 = sphi 0, %s54
      %s72 = sphi 0, %s72
      %s74 = sphi 0, %s72
      %s75 = sphi 0, %s74
      %s89 = sphi 0, %s75
      %s93 = sphi 0, %s93
      %s95 = sphi 0, %s93
      %s96 = sphi 0, %s95
      %s110 = sphi 0, %s96
      %s114 = sphi 0, %s114
      %s116 = sphi 0, %s114
      %s117 = sphi 0, %s116
      %s131 = sphi 0, %s117
      %s137 = sphi 0, %s139
      %s140 = sphi 0, %s137
      %s141 = sphi 0, %s140
      %s157 = sphi 0, %s141
    $region4: #{tpu_custom_call.1} parent=1 // loop_header_branch
      %20 = sbr.rel (%p18) target = $region8
    $region5: #{tpu_custom_call.1} parent=1 // loop_body
      %s22 = ssub.s32 %s17, 1
      %s23 = ssub.s32 %s17, 2
      %s24 = sadd.s32 %s17, 1
      %s25 = ssub.s32 %s17, %s24
      %p26 = scmp.eq.s32.totalorder %s25, 0
      %s28 = sadd.s32 %s27, 1
      %s29 = scalar_select %p26, %s27, %s28
      %p32 = pneg %p26
      %p33 = scmp.eq.s32.totalorder %s17, 1
      %p34 = por %p32, %p33
      %p35 = scmp.ne.s32.totalorder %s27, %s30
      %p36 = scmp.eq.s32.totalorder %s17, 0
      %p37 = por %p35, %p36
      %p38 = scmp.ne.s32.totalorder %s27, %s30
      %p39 = scmp.eq.s32.totalorder %s22, 1
      %p40 = por %p38, %p39
      %p41 = scmp.ne.s32.totalorder %s30, %s31
      %p42 = scmp.eq.s32.totalorder %s22, 0
      %p43 = por %p41, %p42
      %p44 = scmp.ne.s32.totalorder %s30, %s31
      %p45 = scmp.eq.s32.totalorder %s23, 1
      %p46 = por %p44, %p45
      %p48 = scmp.ne.s32.totalorder %s31, %s47
      %p49 = scmp.eq.s32.totalorder %s23, 0
      %p50 = por %p48, %p49
      %s52 = sadd.s32 %s51, 1
      %p55 = scmp.eq.s32.totalorder %s17, 1
      %p56 = scmp.ne.s32.totalorder %s51, %s53
      %p57 = scmp.eq.s32.totalorder %s17, 0
      %p58 = por %p56, %p57
      %p59 = scmp.ne.s32.totalorder %s51, %s53
      %p60 = scmp.eq.s32.totalorder %s22, 1
      %p61 = por %p59, %p60
      %p62 = scmp.ne.s32.totalorder %s53, %s54
      %p63 = scmp.eq.s32.totalorder %s22, 0
      %p64 = por %p62, %p63
      %p65 = scmp.ne.s32.totalorder %s53, %s54
      %p66 = scmp.eq.s32.totalorder %s23, 1
      %p67 = por %p65, %p66
      %p69 = scmp.ne.s32.totalorder %s54, %s68
      %p70 = scmp.eq.s32.totalorder %s23, 0
      %p71 = por %p69, %p70
      %s73 = sadd.s32 %s72, 1
      %p76 = scmp.eq.s32.totalorder %s17, 1
      %p77 = scmp.ne.s32.totalorder %s72, %s74
      %p78 = scmp.eq.s32.totalorder %s17, 0
      %p79 = por %p77, %p78
      %p80 = scmp.ne.s32.totalorder %s72, %s74
      %p81 = scmp.eq.s32.totalorder %s22, 1
      %p82 = por %p80, %p81
      %p83 = scmp.ne.s32.totalorder %s74, %s75
      %p84 = scmp.eq.s32.totalorder %s22, 0
      %p85 = por %p83, %p84
      %p86 = scmp.ne.s32.totalorder %s74, %s75
      %p87 = scmp.eq.s32.totalorder %s23, 1
      %p88 = por %p86, %p87
      %p90 = scmp.ne.s32.totalorder %s75, %s89
      %p91 = scmp.eq.s32.totalorder %s23, 0
      %p92 = por %p90, %p91
      %s94 = sadd.s32 %s93, 1
      %p97 = scmp.eq.s32.totalorder %s17, 1
      %p98 = scmp.ne.s32.totalorder %s93, %s95
      %p99 = scmp.eq.s32.totalorder %s17, 0
      %p100 = por %p98, %p99
      %p101 = scmp.ne.s32.totalorder %s93, %s95
      %p102 = scmp.eq.s32.totalorder %s22, 1
      %p103 = por %p101, %p102
      %p104 = scmp.ne.s32.totalorder %s95, %s96
      %p105 = scmp.eq.s32.totalorder %s22, 0
      %p106 = por %p104, %p105
      %p107 = scmp.ne.s32.totalorder %s95, %s96
      %p108 = scmp.eq.s32.totalorder %s23, 1
      %p109 = por %p107, %p108
      %p111 = scmp.ne.s32.totalorder %s96, %s110
      %p112 = scmp.eq.s32.totalorder %s23, 0
      %p113 = por %p111, %p112
      %s115 = sadd.s32 %s114, 1
      %p118 = scmp.eq.s32.totalorder %s17, 1
      %p119 = scmp.ne.s32.totalorder %s114, %s116
      %p120 = scmp.eq.s32.totalorder %s17, 0
      %p121 = por %p119, %p120
      %p122 = scmp.ne.s32.totalorder %s114, %s116
      %p123 = scmp.eq.s32.totalorder %s22, 1
      %p124 = por %p122, %p123
      %p125 = scmp.ne.s32.totalorder %s116, %s117
      %p126 = scmp.eq.s32.totalorder %s22, 0
      %p127 = por %p125, %p126
      %p128 = scmp.ne.s32.totalorder %s116, %s117
      %p129 = scmp.eq.s32.totalorder %s23, 1
      %p130 = por %p128, %p129
      %p132 = scmp.ne.s32.totalorder %s117, %s131
      %p133 = scmp.eq.s32.totalorder %s23, 0
      %p134 = por %p132, %p133
      %s135 = ssub.s32 %s17, %s24
      %p136 = scmp.eq.s32.totalorder %s135, 0
      %s138 = sadd.s32 %s137, 1
      %s139 = scalar_select %p136, %s137, %s138
      %p142 = pneg %p136
      %p143 = scmp.eq.s32.totalorder %s17, 1
      %p144 = por %p142, %p143
      %p145 = scmp.ne.s32.totalorder %s137, %s140
      %p146 = scmp.eq.s32.totalorder %s17, 0
      %p147 = por %p145, %p146
      %p148 = scmp.ne.s32.totalorder %s137, %s140
      %p149 = scmp.eq.s32.totalorder %s22, 1
      %p150 = por %p148, %p149
      %p151 = scmp.ne.s32.totalorder %s140, %s141
      %p152 = scmp.eq.s32.totalorder %s22, 0
      %p153 = por %p151, %p152
      %p154 = scmp.ne.s32.totalorder %s140, %s141
      %p155 = scmp.eq.s32.totalorder %s23, 1
      %p156 = por %p154, %p155
      %p158 = scmp.ne.s32.totalorder %s141, %s157
      %p159 = scmp.eq.s32.totalorder %s23, 0
      %p160 = por %p158, %p159
      %p161 = scmp.le.s32.totalorder 1, %s17
      %p162 = scmp.lt.s32.totalorder %s17, 3
      %p163 = pnand %p161, %p162
      %p164 = pneg %p163
      // Predicated region
      $region9: #{tpu_custom_call.1} parent=5 // pred_check
        _
      $region10: #{tpu_custom_call.1} parent=5 // pred_check_branch
        %166 = sbr.rel (%p163) target = $region12
      $region11: #{tpu_custom_call.1} parent=5 // pred_region
        %s167 = ssub.s32 %s17, 1
        // Predicated region
        $region13: #{tpu_custom_call.1} parent=11 // pred_check
          %p168 = pneg %p64
        $region14: #{tpu_custom_call.1} parent=11 // pred_check_branch
          %170 = sbr.rel (%p168) target = $region16
        $region15: #{tpu_custom_call.1} parent=11 // pred_region
          _
        $region16: #{tpu_custom_call.1} parent=11 // pred_fallthru
          _
        // Predicated region
        $region17: #{tpu_custom_call.1} parent=11 // pred_check
          %p171 = pneg %p85
        $region18: #{tpu_custom_call.1} parent=11 // pred_check_branch
          %173 = sbr.rel (%p171) target = $region20
        $region19: #{tpu_custom_call.1} parent=11 // pred_region
          _
        $region20: #{tpu_custom_call.1} parent=11 // pred_fallthru
          _
        // Predicated region
        $region21: #{tpu_custom_call.1} parent=11 // pred_check
          %p174 = pneg %p106
        $region22: #{tpu_custom_call.1} parent=11 // pred_check_branch
          %176 = sbr.rel (%p174) target = $region24
        $region23: #{tpu_custom_call.1} parent=11 // pred_region
          _
        $region24: #{tpu_custom_call.1} parent=11 // pred_fallthru
          _
        // Predicated region
        $region25: #{tpu_custom_call.1} parent=11 // pred_check
          %p177 = pneg %p127
        $region26: #{tpu_custom_call.1} parent=11 // pred_check_branch
          %179 = sbr.rel (%p177) target = $region28
        $region27: #{tpu_custom_call.1} parent=11 // pred_region
          _
        $region28: #{tpu_custom_call.1} parent=11 // pred_fallthru
          _
      $region12: #{tpu_custom_call.1} parent=5 // pred_fallthru
        _
      %p180 = scmp.lt.s32.totalorder %s17, 2
      // Predicated region
      $region29: #{tpu_custom_call.1} parent=5 // pred_check
        %p181 = pneg %p180
      $region30: #{tpu_custom_call.1} parent=5 // pred_check_branch
        %183 = sbr.rel (%p181) target = $region32
      $region31: #{tpu_custom_call.1} parent=5 // pred_region
        // Predicated region
        $region33: #{tpu_custom_call.1} parent=31 // pred_check
          %p184 = pneg %p37
        $region34: #{tpu_custom_call.1} parent=31 // pred_check_branch
          %186 = sbr.rel (%p184) target = $region36
        $region35: #{tpu_custom_call.1} parent=31 // pred_region
          %s187 = sand.u32 %s27, 1
          %s188 = scalar_lea.sflag [#allocation3], %s187
          %s189 = sand.u32 %s27, 1
          %s190 = smul.addr %s189, 64
          %s191 = scalar_lea.vmem [#allocation2], %s190
          %s193 = ssub.s32 1024, 1024
          %194 = vsyncadd %s188, %s193
          %s195 = smul.addr %s17, 16
          %s196 = smul.addr %s195, 64
          %s197 = scalar_lea.hbm %s0, %s196
          %s198 = sshll.u32 %s191, 4
          %s199 = int_to_ptr.vmem [resolvable:$true] %s198
          %204 = dma.hbm_to_vmem [thread:$0]  %s197, 1024, %s199, %s188, 128, 128, 8
        $region36: #{tpu_custom_call.1} parent=31 // pred_fallthru
          _
      $region32: #{tpu_custom_call.1} parent=5 // pred_fallthru
        _
      %p205 = scmp.le.s32.totalorder 1, %s17
      %p206 = scmp.lt.s32.totalorder %s17, 3
      %p207 = pnand %p205, %p206
      %p208 = pneg %p207
      // Predicated region
      $region37: #{tpu_custom_call.1} parent=5 // pred_check
        _
      $region38: #{tpu_custom_call.1} parent=5 // pred_check_branch
        %210 = sbr.rel (%p207) target = $region40
      $region39: #{tpu_custom_call.1} parent=5 // pred_region
        %s211 = ssub.s32 %s17, 1
        %s212 = sand.u32 %s30, 1
        %s213 = scalar_lea.sflag [#allocation3], %s212
        %s214 = sand.u32 %s30, 1
        %s215 = smul.addr %s214, 64
        %s216 = scalar_lea.vmem [#allocation2], %s215
        // Predicated region
        $region41: #{tpu_custom_call.1} parent=39 // pred_check
          %p217 = pneg %p43
        $region42: #{tpu_custom_call.1} parent=39 // pred_check_branch
          %219 = sbr.rel (%p217) target = $region44
        $region43: #{tpu_custom_call.1} parent=39 // pred_region
          %220 = dma.done %s213, 1024
        $region44: #{tpu_custom_call.1} parent=39 // pred_fallthru
          _
        %s221 = sand.u32 %s30, 1
        %s222 = scalar_lea.sflag [#allocation3], %s221
        %s223 = sand.u32 %s30, 1
        %s224 = smul.addr %s223, 64
        %s225 = scalar_lea.vmem [#allocation2], %s224
        %p226 = pneg %p43
        %p227 = pneg %p40
        %p228 = pneg %p64
        %p229 = pneg %p61
        %p230 = pneg %p85
        %p231 = pneg %p82
        %p232 = pneg %p106
        %p233 = pneg %p103
        %p234 = pneg %p127
        %p235 = pneg %p124
        %p236 = pneg %p153
        %p237 = pneg %p150
        %s238 = sand.u32 %s140, 1
        %s239 = scalar_lea.sflag [#allocation4], %s238
        %s240 = sand.u32 %s140, 1
        %s241 = smul.addr %s240, 128
        %s242 = scalar_lea.vmem [#allocation5], %s241
        %v244 = vld [vmem:[%s1] sm:$0xf]
        %v245 = vld [vmem:[%s1 + $0x4] sm:$0xf]
        %v246 = vld [vmem:[%s1 + $0x8] sm:$0xf]
        %v247 = vld [vmem:[%s1 + $0xc] sm:$0xf]
        %v248 = vld [vmem:[%s216] sm:$0xff]
        %v249 = vld [vmem:[%s216 + $0x8] sm:$0xff]
        %v250 = vld [vmem:[%s216 + $0x10] sm:$0xff]
        %v251 = vld [vmem:[%s216 + $0x18] sm:$0xff]
        %v252 = vld [vmem:[%s216 + $0x20] sm:$0xff]
        %v253 = vld [vmem:[%s216 + $0x28] sm:$0xff]
        %v254 = vld [vmem:[%s216 + $0x30] sm:$0xff]
        %v255 = vld [vmem:[%s216 + $0x38] sm:$0xff]
        %v256 = vld [vmem:[%s2] sm:$0xff]
        %v257 = vld [vmem:[%s2 + $0x8] sm:$0xff]
        %v258 = vld [vmem:[%s2 + $0x10] sm:$0xff]
        %v259 = vld [vmem:[%s2 + $0x18] sm:$0xff]
        %261 = vset.pattern.permute.xlu0 0
        %262 = vperm.xlu0 %261, %v256
        %v263 = vpop.permute.xlu0 %262
        %266 = vset.pattern.permute.xlu0 0
        %267 = vperm.xlu0 %266, %v257
        %v268 = vpop.permute.xlu0 %267
        %271 = vset.pattern.permute.xlu0 0
        %272 = vperm.xlu0 %271, %v258
        %v273 = vpop.permute.xlu0 %272
        %276 = vset.pattern.permute.xlu0 0
        %277 = vperm.xlu0 %276, %v259
        %v278 = vpop.permute.xlu0 %277
        %v284 = vunpack.c.l.b16 %v244
        %v285 = vunpack.c.l.b16 %v245
        %v286 = vunpack.c.l.b16 %v246
        %v287 = vunpack.c.l.b16 %v247
        %v288 = vpack.c.b16 %v285, %v284
        %v289 = vpack.c.b16 %v287, %v286
        %v298 = vunpack.c.l.b16 %v248
        %v299 = vunpack.c.h.b16 %v248
        %v300 = vunpack.c.l.b16 %v249
        %v301 = vunpack.c.h.b16 %v249
        %v302 = vunpack.c.l.b16 %v250
        %v303 = vunpack.c.h.b16 %v250
        %v304 = vunpack.c.l.b16 %v251
        %v305 = vunpack.c.h.b16 %v251
        %v306 = vunpack.c.l.b16 %v252
        %v307 = vunpack.c.h.b16 %v252
        %v308 = vunpack.c.l.b16 %v253
        %v309 = vunpack.c.h.b16 %v253
        %v310 = vunpack.c.l.b16 %v254
        %v311 = vunpack.c.h.b16 %v254
        %v312 = vunpack.c.l.b16 %v255
        %v313 = vunpack.c.h.b16 %v255
        %v314 = vpack.c.b16 %v300, %v298
        %v315 = vpack.c.b16 %v301, %v299
        %v316 = vpack.c.b16 %v304, %v302
        %v317 = vpack.c.b16 %v305, %v303
        %v318 = vpack.c.b16 %v308, %v306
        %v319 = vpack.c.b16 %v309, %v307
        %v320 = vpack.c.b16 %v312, %v310
        %v321 = vpack.c.b16 %v313, %v311
        %vm330 = vcmask 523264
        %v332 = vsel %vm330, %v288, 0
        %v335 = vsel %vm330, %v289, 0
        %337 = vmatprep.subr.bf16.mxu0 %v315
        %338 = vmatpush1.bf16.msra.mxu0 %v314
        %339 = vmatprep.subr.bf16.mxu0 %v317
        %340 = vmatpush1.bf16.msra.mxu0 %v316
        %341 = vmatprep.subr.bf16.mxu0 %v319
        %342 = vmatpush1.bf16.msra.mxu0 %v318
        %343 = vmatprep.subr.bf16.mxu0 %v321
        %344 = vmatpush1.bf16.msra.mxu0 %v320
        %345 = vmatprep.subr.bf16.mxu0 0
        %346 = vmatpush1.bf16.msra.mxu0 0
        %347 = vmatprep.subr.bf16.mxu0 0
        %348 = vmatpush1.bf16.msra.mxu0 0
        %349 = vmatprep.subr.bf16.mxu0 0
        %350 = vmatpush1.bf16.msra.mxu0 0
        %351 = vmatprep.subr.bf16.mxu0 0
        %352 = vmatpush1.bf16.msra.mxu0 0
        %353 = vmatprep.subr.bf16.mxu0 0
        %354 = vmatpush1.bf16.msra.mxu0 0
        %355 = vmatprep.subr.bf16.mxu0 0
        %356 = vmatpush1.bf16.msra.mxu0 0
        %357 = vmatprep.subr.bf16.mxu0 0
        %358 = vmatpush1.bf16.msra.mxu0 0
        %359 = vmatprep.subr.bf16.mxu0 0
        %360 = vmatpush1.bf16.msra.mxu0 0
        %361 = vmatprep.subr.bf16.mxu0 0
        %362 = vmatpush1.bf16.msra.mxu0 0
        %363 = vmatprep.subr.bf16.mxu0 0
        %364 = vmatpush1.bf16.msra.mxu0 0
        %365 = vmatprep.subr.bf16.mxu0 0
        %366 = vmatpush1.bf16.msra.mxu0 0
        %367 = vmatprep.subr.bf16.mxu0 0
        %368 = vmatpush1.bf16.msra.mxu0 0
        %369 = vmatprep.mubr.bf16.mxu0 0
        %370 = vmatmul.mubr.bf16.gmra.mrb[0].mxu0 %v332
        %v371 = vpop.f32.mrb[0].mxu0
        %v372 = vadd.f32 %v263, %v371
        %v373 = vpop.f32.mrb[0].mxu0
        %v374 = vadd.f32 %v263, %v373
        %v375 = vpop.f32.mrb[0].mxu0
        %v376 = vadd.f32 %v268, %v375
        %v377 = vpop.f32.mrb[0].mxu0
        %v378 = vadd.f32 %v268, %v377
        %379 = vmatprep.mubr.bf16.mxu0 0
        %380 = vmatmul.mubr.bf16.gmra.mrb[0].mxu0 %v335
        %v381 = vpop.f32.mrb[0].mxu0
        %v382 = vadd.f32 %v273, %v381
        %v383 = vpop.f32.mrb[0].mxu0
        %v384 = vadd.f32 %v273, %v383
        %v385 = vpop.f32.mrb[0].mxu0
        %v386 = vadd.f32 %v278, %v385
        %v387 = vpop.f32.mrb[0].mxu0
        %v388 = vadd.f32 %v278, %v387
        %389 = vdwg.mxu0
        %v390 = vsub.f32 0.0, %v372
        %v391 = vsub.f32 0.0, %v374
        %v392 = vsub.f32 0.0, %v376
        %v393 = vsub.f32 0.0, %v378
        %v394 = vsub.f32 0.0, %v382
        %v395 = vsub.f32 0.0, %v384
        %v396 = vsub.f32 0.0, %v386
        %v397 = vsub.f32 0.0, %v388
        %v398 = vmul.f32 %v390, 1.442695
        %v399 = vpow.pop %v398
        %v400 = vmul.f32 %v391, 1.442695
        %v401 = vpow.pop %v400
        %v402 = vmul.f32 %v392, 1.442695
        %v403 = vpow.pop %v402
        %v404 = vmul.f32 %v393, 1.442695
        %v405 = vpow.pop %v404
        %v406 = vmul.f32 %v394, 1.442695
        %v407 = vpow.pop %v406
        %v408 = vmul.f32 %v395, 1.442695
        %v409 = vpow.pop %v408
        %v410 = vmul.f32 %v396, 1.442695
        %v411 = vpow.pop %v410
        %v412 = vmul.f32 %v397, 1.442695
        %v413 = vpow.pop %v412
        %v414 = vadd.f32 %v399, 1.0
        %v415 = vadd.f32 %v401, 1.0
        %v416 = vadd.f32 %v403, 1.0
        %v417 = vadd.f32 %v405, 1.0
        %v418 = vadd.f32 %v407, 1.0
        %v419 = vadd.f32 %v409, 1.0
        %v420 = vadd.f32 %v411, 1.0
        %v421 = vadd.f32 %v413, 1.0
        %v422 = vrcp.pop %v414
        %v423 = vrcp.pop %v415
        %v424 = vrcp.pop %v416
        %v425 = vrcp.pop %v417
        %v426 = vrcp.pop %v418
        %v427 = vrcp.pop %v419
        %v428 = vrcp.pop %v420
        %v429 = vrcp.pop %v421
        %v430 = vmul.f32 %v372, %v422
        %v431 = vmul.f32 %v374, %v423
        %v432 = vmul.f32 %v376, %v424
        %v433 = vmul.f32 %v378, %v425
        %v434 = vmul.f32 %v382, %v426
        %v435 = vmul.f32 %v384, %v427
        %v436 = vmul.f32 %v386, %v428
        %v437 = vmul.f32 %v388, %v429
        %v438 = vlaneseq
        %v439 = vand.u32 %v438, 127
        %v440 = vadd.s32 %v439, 128
        %vm441 = vcmp.lt.s32.totalorder %v439, 0
        %v442 = vsub.s32 0, %v439
        %v443 = vsel %vm441, %v442, %v439
        %v444 = vshrl.u32 %v443, 4
        %v445 = vand.u32 %v443, 15
        %v446 = vsub.s32 0, %v445
        %v447 = vsel %vm441, %v446, %v445
        %vm448 = vcmp.lt.s32.totalorder %v440, 0
        %v449 = vsub.s32 0, %v440
        %v450 = vsel %vm448, %v449, %v440
        %v451 = vshrl.u32 %v450, 4
        %v452 = vand.u32 %v450, 15
        %v453 = vsub.s32 0, %v452
        %v454 = vsel %vm448, %v453, %v452
        %vm455 = vcmp.ne.s32.totalorder %v447, 0
        %vm456 = vcmp.ne.s32.totalorder %v454, 0
        %vm457 = vcmp.lt.s32.totalorder %v447, 0
        %vm458 = vcmp.lt.s32.totalorder %v454, 0
        %vm459 = vmand %vm457, %vm455
        %vm460 = vmand %vm458, %vm456
        %v461 = vadd.s32 %v447, 16
        %v462 = vadd.s32 %v454, 16
        %v463 = vsel %vm459, %v461, %v447
        %v464 = vsel %vm460, %v462, %v454
        %vm465 = vcmp.lt.s32.totalorder %v463, 15
        %vm466 = vcmp.lt.s32.totalorder %v464, 15
        %vm467 = vcmp.lt.s32.totalorder %v463, 14
        %vm468 = vcmp.lt.s32.totalorder %v464, 14
        %vm469 = vcmp.ge.s32.totalorder %v463, 1
        %vm470 = vcmp.ge.s32.totalorder %v464, 1
        %vm471 = vcmp.ge.s32.totalorder %v463, 2
        %vm472 = vcmp.ge.s32.totalorder %v464, 2
        %vm473 = vcmp.lt.s32.totalorder %v439, 240
        %vm474 = vcmp.lt.s32.totalorder %v440, 240
        %vm475 = vcmp.lt.s32.totalorder %v439, 224
        %vm476 = vcmp.lt.s32.totalorder %v440, 224
        %vm477 = vcmp.ge.s32.totalorder %v439, 16
        %vm478 = vcmp.ge.s32.totalorder %v440, 16
        %vm479 = vcmp.ge.s32.totalorder %v439, 32
        %vm480 = vcmp.ge.s32.totalorder %v440, 32
        %481 = vrot.lane.b32.xlu0 %v430, 127
        %v482 = vpop.permute.xlu0 %481
        %483 = vrot.lane.b32.xlu0 %v432, 127
        %v484 = vpop.permute.xlu0 %483
        %485 = vrot.lane.b32.xlu0 %v434, 127
        %v486 = vpop.permute.xlu0 %485
        %487 = vrot.lane.b32.xlu0 %v436, 127
        %v488 = vpop.permute.xlu0 %487
        %489 = vrot.lane.b32.xlu0 %v431, 127
        %v490 = vpop.permute.xlu0 %489
        %491 = vrot.lane.b32.xlu0 %v433, 127
        %v492 = vpop.permute.xlu0 %491
        %493 = vrot.lane.b32.xlu0 %v435, 127
        %v494 = vpop.permute.xlu0 %493
        %495 = vrot.lane.b32.xlu0 %v437, 127
        %v496 = vpop.permute.xlu0 %495
        %vm497 = vcmp.lt.s32.totalorder %v439, 127
        %v498 = vsel %vm497, %v482, %v490
        %v499 = vsel %vm497, %v484, %v492
        %v500 = vsel %vm497, %v486, %v494
        %v501 = vsel %vm497, %v488, %v496
        %v502 = vsel %vm497, %v490, %v482
        %v503 = vsel %vm497, %v492, %v484
        %v504 = vsel %vm497, %v494, %v486
        %v505 = vsel %vm497, %v496, %v488
        %v506 = vsel %vm465, 1, 0
        %v507 = vsel %vm466, 1, 0
        %vm508 = vcmp.eq.s32.totalorder %v506, 1
        %vm509 = vcmp.eq.s32.totalorder %v507, 1
        %v510 = vsel %vm508, %v498, -3e+38
        %v511 = vsel %vm509, %v502, -3e+38
        %v512 = vsel %vm508, %v499, -3e+38
        %v513 = vsel %vm509, %v503, -3e+38
        %v514 = vsel %vm508, %v500, -3e+38
        %v515 = vsel %vm509, %v504, -3e+38
        %v516 = vsel %vm508, %v501, -3e+38
        %v517 = vsel %vm509, %v505, -3e+38
        %v518 = vmax.f32 %v430, %v510
        %v519 = vmax.f32 %v431, %v511
        %v520 = vmax.f32 %v432, %v512
        %v521 = vmax.f32 %v433, %v513
        %v522 = vmax.f32 %v434, %v514
        %v523 = vmax.f32 %v435, %v515
        %v524 = vmax.f32 %v436, %v516
        %v525 = vmax.f32 %v437, %v517
        %526 = vrot.lane.b32.xlu0 %v430, 126
        %v527 = vpop.permute.xlu0 %526
        %528 = vrot.lane.b32.xlu0 %v432, 126
        %v529 = vpop.permute.xlu0 %528
        %530 = vrot.lane.b32.xlu0 %v434, 126
        %v531 = vpop.permute.xlu0 %530
        %532 = vrot.lane.b32.xlu0 %v436, 126
        %v533 = vpop.permute.xlu0 %532
        %534 = vrot.lane.b32.xlu0 %v431, 126
        %v535 = vpop.permute.xlu0 %534
        %536 = vrot.lane.b32.xlu0 %v433, 126
        %v537 = vpop.permute.xlu0 %536
        %538 = vrot.lane.b32.xlu0 %v435, 126
        %v539 = vpop.permute.xlu0 %538
        %540 = vrot.lane.b32.xlu0 %v437, 126
        %v541 = vpop.permute.xlu0 %540
        %vm542 = vcmp.lt.s32.totalorder %v439, 126
        %v543 = vsel %vm542, %v527, %v535
        %v544 = vsel %vm542, %v529, %v537
        %v545 = vsel %vm542, %v531, %v539
        %v546 = vsel %vm542, %v533, %v541
        %v547 = vsel %vm542, %v535, %v527
        %v548 = vsel %vm542, %v537, %v529
        %v549 = vsel %vm542, %v539, %v531
        %v550 = vsel %vm542, %v541, %v533
        %v551 = vsel %vm467, 1, 0
        %v552 = vsel %vm468, 1, 0
        %vm553 = vcmp.eq.s32.totalorder %v551, 1
        %vm554 = vcmp.eq.s32.totalorder %v552, 1
        %v555 = vsel %vm553, %v543, -3e+38
        %v556 = vsel %vm554, %v547, -3e+38
        %v557 = vsel %vm553, %v544, -3e+38
        %v558 = vsel %vm554, %v548, -3e+38
        %v559 = vsel %vm553, %v545, -3e+38
        %v560 = vsel %vm554, %v549, -3e+38
        %v561 = vsel %vm553, %v546, -3e+38
        %v562 = vsel %vm554, %v550, -3e+38
        %v563 = vmax.f32 %v518, %v555
        %v564 = vmax.f32 %v519, %v556
        %v565 = vmax.f32 %v520, %v557
        %v566 = vmax.f32 %v521, %v558
        %v567 = vmax.f32 %v522, %v559
        %v568 = vmax.f32 %v523, %v560
        %v569 = vmax.f32 %v524, %v561
        %v570 = vmax.f32 %v525, %v562
        %571 = vrot.lane.b32.xlu0 %v430, 1
        %v572 = vpop.permute.xlu0 %571
        %573 = vrot.lane.b32.xlu0 %v432, 1
        %v574 = vpop.permute.xlu0 %573
        %575 = vrot.lane.b32.xlu0 %v434, 1
        %v576 = vpop.permute.xlu0 %575
        %577 = vrot.lane.b32.xlu0 %v436, 1
        %v578 = vpop.permute.xlu0 %577
        %579 = vrot.lane.b32.xlu0 %v431, 1
        %v580 = vpop.permute.xlu0 %579
        %581 = vrot.lane.b32.xlu0 %v433, 1
        %v582 = vpop.permute.xlu0 %581
        %583 = vrot.lane.b32.xlu0 %v435, 1
        %v584 = vpop.permute.xlu0 %583
        %585 = vrot.lane.b32.xlu0 %v437, 1
        %v586 = vpop.permute.xlu0 %585
        %vm587 = vcmp.lt.s32.totalorder %v439, 1
        %v588 = vsel %vm587, %v572, %v580
        %v589 = vsel %vm587, %v574, %v582
        %v590 = vsel %vm587, %v576, %v584
        %v591 = vsel %vm587, %v578, %v586
        %v592 = vsel %vm587, %v580, %v572
        %v593 = vsel %vm587, %v582, %v574
        %v594 = vsel %vm587, %v584, %v576
        %v595 = vsel %vm587, %v586, %v578
        %v596 = vsel %vm469, 1, 0
        %v597 = vsel %vm470, 1, 0
        %vm598 = vcmp.eq.s32.totalorder %v596, 1
        %vm599 = vcmp.eq.s32.totalorder %v597, 1
        %v600 = vsel %vm598, %v592, -3e+38
        %v601 = vsel %vm599, %v588, -3e+38
        %v602 = vsel %vm598, %v593, -3e+38
        %v603 = vsel %vm599, %v589, -3e+38
        %v604 = vsel %vm598, %v594, -3e+38
        %v605 = vsel %vm599, %v590, -3e+38
        %v606 = vsel %vm598, %v595, -3e+38
        %v607 = vsel %vm599, %v591, -3e+38
        %v608 = vmax.f32 %v563, %v600
        %v609 = vmax.f32 %v564, %v601
        %v610 = vmax.f32 %v565, %v602
        %v611 = vmax.f32 %v566, %v603
        %v612 = vmax.f32 %v567, %v604
        %v613 = vmax.f32 %v568, %v605
        %v614 = vmax.f32 %v569, %v606
        %v615 = vmax.f32 %v570, %v607
        %616 = vrot.lane.b32.xlu0 %v430, 2
        %v617 = vpop.permute.xlu0 %616
        %618 = vrot.lane.b32.xlu0 %v432, 2
        %v619 = vpop.permute.xlu0 %618
        %620 = vrot.lane.b32.xlu0 %v434, 2
        %v621 = vpop.permute.xlu0 %620
        %622 = vrot.lane.b32.xlu0 %v436, 2
        %v623 = vpop.permute.xlu0 %622
        %624 = vrot.lane.b32.xlu0 %v431, 2
        %v625 = vpop.permute.xlu0 %624
        %626 = vrot.lane.b32.xlu0 %v433, 2
        %v627 = vpop.permute.xlu0 %626
        %628 = vrot.lane.b32.xlu0 %v435, 2
        %v629 = vpop.permute.xlu0 %628
        %630 = vrot.lane.b32.xlu0 %v437, 2
        %v631 = vpop.permute.xlu0 %630
        %vm632 = vcmp.lt.s32.totalorder %v439, 2
        %v633 = vsel %vm632, %v617, %v625
        %v634 = vsel %vm632, %v619, %v627
        %v635 = vsel %vm632, %v621, %v629
        %v636 = vsel %vm632, %v623, %v631
        %v637 = vsel %vm632, %v625, %v617
        %v638 = vsel %vm632, %v627, %v619
        %v639 = vsel %vm632, %v629, %v621
        %v640 = vsel %vm632, %v631, %v623
        %v641 = vsel %vm471, 1, 0
        %v642 = vsel %vm472, 1, 0
        %vm643 = vcmp.eq.s32.totalorder %v641, 1
        %vm644 = vcmp.eq.s32.totalorder %v642, 1
        %v645 = vsel %vm643, %v637, -3e+38
        %v646 = vsel %vm644, %v633, -3e+38
        %v647 = vsel %vm643, %v638, -3e+38
        %v648 = vsel %vm644, %v634, -3e+38
        %v649 = vsel %vm643, %v639, -3e+38
        %v650 = vsel %vm644, %v635, -3e+38
        %v651 = vsel %vm643, %v640, -3e+38
        %v652 = vsel %vm644, %v636, -3e+38
        %v653 = vmax.f32 %v608, %v645
        %v654 = vmax.f32 %v609, %v646
        %v655 = vmax.f32 %v610, %v647
        %v656 = vmax.f32 %v611, %v648
        %v657 = vmax.f32 %v612, %v649
        %v658 = vmax.f32 %v613, %v650
        %v659 = vmax.f32 %v614, %v651
        %v660 = vmax.f32 %v615, %v652
        %661 = vrot.lane.b32.xlu0 %v653, 112
        %v662 = vpop.permute.xlu0 %661
        %663 = vrot.lane.b32.xlu0 %v655, 112
        %v664 = vpop.permute.xlu0 %663
        %665 = vrot.lane.b32.xlu0 %v657, 112
        %v666 = vpop.permute.xlu0 %665
        %667 = vrot.lane.b32.xlu0 %v659, 112
        %v668 = vpop.permute.xlu0 %667
        %669 = vrot.lane.b32.xlu0 %v654, 112
        %v670 = vpop.permute.xlu0 %669
        %671 = vrot.lane.b32.xlu0 %v656, 112
        %v672 = vpop.permute.xlu0 %671
        %673 = vrot.lane.b32.xlu0 %v658, 112
        %v674 = vpop.permute.xlu0 %673
        %675 = vrot.lane.b32.xlu0 %v660, 112
        %v676 = vpop.permute.xlu0 %675
        %vm677 = vcmp.lt.s32.totalorder %v439, 112
        %v678 = vsel %vm677, %v662, %v670
        %v679 = vsel %vm677, %v664, %v672
        %v680 = vsel %vm677, %v666, %v674
        %v681 = vsel %vm677, %v668, %v676
        %v682 = vsel %vm677, %v670, %v662
        %v683 = vsel %vm677, %v672, %v664
        %v684 = vsel %vm677, %v674, %v666
        %v685 = vsel %vm677, %v676, %v668
        %v686 = vsel %vm473, 1, 0
        %v687 = vsel %vm474, 1, 0
        %vm688 = vcmp.eq.s32.totalorder %v686, 1
        %vm689 = vcmp.eq.s32.totalorder %v687, 1
        %v690 = vsel %vm688, %v678, -3e+38
        %v691 = vsel %vm689, %v682, -3e+38
        %v692 = vsel %vm688, %v679, -3e+38
        %v693 = vsel %vm689, %v683, -3e+38
        %v694 = vsel %vm688, %v680, -3e+38
        %v695 = vsel %vm689, %v684, -3e+38
        %v696 = vsel %vm688, %v681, -3e+38
        %v697 = vsel %vm689, %v685, -3e+38
        %v698 = vmax.f32 %v653, %v690
        %v699 = vmax.f32 %v654, %v691
        %v700 = vmax.f32 %v655, %v692
        %v701 = vmax.f32 %v656, %v693
        %v702 = vmax.f32 %v657, %v694
        %v703 = vmax.f32 %v658, %v695
        %v704 = vmax.f32 %v659, %v696
        %v705 = vmax.f32 %v660, %v697
        %706 = vrot.lane.b32.xlu0 %v653, 96
        %v707 = vpop.permute.xlu0 %706
        %708 = vrot.lane.b32.xlu0 %v655, 96
        %v709 = vpop.permute.xlu0 %708
        %710 = vrot.lane.b32.xlu0 %v657, 96
        %v711 = vpop.permute.xlu0 %710
        %712 = vrot.lane.b32.xlu0 %v659, 96
        %v713 = vpop.permute.xlu0 %712
        %714 = vrot.lane.b32.xlu0 %v654, 96
        %v715 = vpop.permute.xlu0 %714
        %716 = vrot.lane.b32.xlu0 %v656, 96
        %v717 = vpop.permute.xlu0 %716
        %718 = vrot.lane.b32.xlu0 %v658, 96
        %v719 = vpop.permute.xlu0 %718
        %720 = vrot.lane.b32.xlu0 %v660, 96
        %v721 = vpop.permute.xlu0 %720
        %vm722 = vcmp.lt.s32.totalorder %v439, 96
        %v723 = vsel %vm722, %v707, %v715
        %v724 = vsel %vm722, %v709, %v717
        %v725 = vsel %vm722, %v711, %v719
        %v726 = vsel %vm722, %v713, %v721
        %v727 = vsel %vm722, %v715, %v707
        %v728 = vsel %vm722, %v717, %v709
        %v729 = vsel %vm722, %v719, %v711
        %v730 = vsel %vm722, %v721, %v713
        %v731 = vsel %vm475, 1, 0
        %v732 = vsel %vm476, 1, 0
        %vm733 = vcmp.eq.s32.totalorder %v731, 1
        %vm734 = vcmp.eq.s32.totalorder %v732, 1
        %v735 = vsel %vm733, %v723, -3e+38
        %v736 = vsel %vm734, %v727, -3e+38
        %v737 = vsel %vm733, %v724, -3e+38
        %v738 = vsel %vm734, %v728, -3e+38
        %v739 = vsel %vm733, %v725, -3e+38
        %v740 = vsel %vm734, %v729, -3e+38
        %v741 = vsel %vm733, %v726, -3e+38
        %v742 = vsel %vm734, %v730, -3e+38
        %v743 = vmax.f32 %v698, %v735
        %v744 = vmax.f32 %v699, %v736
        %v745 = vmax.f32 %v700, %v737
        %v746 = vmax.f32 %v701, %v738
        %v747 = vmax.f32 %v702, %v739
        %v748 = vmax.f32 %v703, %v740
        %v749 = vmax.f32 %v704, %v741
        %v750 = vmax.f32 %v705, %v742
        %751 = vrot.lane.b32.xlu0 %v653, 16
        %v752 = vpop.permute.xlu0 %751
        %753 = vrot.lane.b32.xlu0 %v655, 16
        %v754 = vpop.permute.xlu0 %753
        %755 = vrot.lane.b32.xlu0 %v657, 16
        %v756 = vpop.permute.xlu0 %755
        %757 = vrot.lane.b32.xlu0 %v659, 16
        %v758 = vpop.permute.xlu0 %757
        %759 = vrot.lane.b32.xlu0 %v654, 16
        %v760 = vpop.permute.xlu0 %759
        %761 = vrot.lane.b32.xlu0 %v656, 16
        %v762 = vpop.permute.xlu0 %761
        %763 = vrot.lane.b32.xlu0 %v658, 16
        %v764 = vpop.permute.xlu0 %763
        %765 = vrot.lane.b32.xlu0 %v660, 16
        %v766 = vpop.permute.xlu0 %765
        %vm767 = vcmp.lt.s32.totalorder %v439, 16
        %v768 = vsel %vm767, %v752, %v760
        %v769 = vsel %vm767, %v754, %v762
        %v770 = vsel %vm767, %v756, %v764
        %v771 = vsel %vm767, %v758, %v766
        %v772 = vsel %vm767, %v760, %v752
        %v773 = vsel %vm767, %v762, %v754
        %v774 = vsel %vm767, %v764, %v756
        %v775 = vsel %vm767, %v766, %v758
        %v776 = vsel %vm477, 1, 0
        %v777 = vsel %vm478, 1, 0
        %vm778 = vcmp.eq.s32.totalorder %v776, 1
        %vm779 = vcmp.eq.s32.totalorder %v777, 1
        %v780 = vsel %vm778, %v772, -3e+38
        %v781 = vsel %vm779, %v768, -3e+38
        %v782 = vsel %vm778, %v773, -3e+38
        %v783 = vsel %vm779, %v769, -3e+38
        %v784 = vsel %vm778, %v774, -3e+38
        %v785 = vsel %vm779, %v770, -3e+38
        %v786 = vsel %vm778, %v775, -3e+38
        %v787 = vsel %vm779, %v771, -3e+38
        %v788 = vmax.f32 %v743, %v780
        %v789 = vmax.f32 %v744, %v781
        %v790 = vmax.f32 %v745, %v782
        %v791 = vmax.f32 %v746, %v783
        %v792 = vmax.f32 %v747, %v784
        %v793 = vmax.f32 %v748, %v785
        %v794 = vmax.f32 %v749, %v786
        %v795 = vmax.f32 %v750, %v787
        %796 = vrot.lane.b32.xlu0 %v653, 32
        %v797 = vpop.permute.xlu0 %796
        %798 = vrot.lane.b32.xlu0 %v655, 32
        %v799 = vpop.permute.xlu0 %798
        %800 = vrot.lane.b32.xlu0 %v657, 32
        %v801 = vpop.permute.xlu0 %800
        %802 = vrot.lane.b32.xlu0 %v659, 32
        %v803 = vpop.permute.xlu0 %802
        %804 = vrot.lane.b32.xlu0 %v654, 32
        %v805 = vpop.permute.xlu0 %804
        %806 = vrot.lane.b32.xlu0 %v656, 32
        %v807 = vpop.permute.xlu0 %806
        %808 = vrot.lane.b32.xlu0 %v658, 32
        %v809 = vpop.permute.xlu0 %808
        %810 = vrot.lane.b32.xlu0 %v660, 32
        %v811 = vpop.permute.xlu0 %810
        %vm812 = vcmp.lt.s32.totalorder %v439, 32
        %v813 = vsel %vm812, %v797, %v805
        %v814 = vsel %vm812, %v799, %v807
        %v815 = vsel %vm812, %v801, %v809
        %v816 = vsel %vm812, %v803, %v811
        %v817 = vsel %vm812, %v805, %v797
        %v818 = vsel %vm812, %v807, %v799
        %v819 = vsel %vm812, %v809, %v801
        %v820 = vsel %vm812, %v811, %v803
        %v821 = vsel %vm479, 1, 0
        %v822 = vsel %vm480, 1, 0
        %vm823 = vcmp.eq.s32.totalorder %v821, 1
        %vm824 = vcmp.eq.s32.totalorder %v822, 1
        %v825 = vsel %vm823, %v817, -3e+38
        %v826 = vsel %vm824, %v813, -3e+38
        %v827 = vsel %vm823, %v818, -3e+38
        %v828 = vsel %vm824, %v814, -3e+38
        %v829 = vsel %vm823, %v819, -3e+38
        %v830 = vsel %vm824, %v815, -3e+38
        %v831 = vsel %vm823, %v820, -3e+38
        %v832 = vsel %vm824, %v816, -3e+38
        %v833 = vmax.f32 %v788, %v825
        %v834 = vmax.f32 %v789, %v826
        %v835 = vmax.f32 %v790, %v827
        %v836 = vmax.f32 %v791, %v828
        %v837 = vmax.f32 %v792, %v829
        %v838 = vmax.f32 %v793, %v830
        %v839 = vmax.f32 %v794, %v831
        %v840 = vmax.f32 %v795, %v832
        %841 = vrot.lane.b32.xlu0 %v833, 127
        %v842 = vpop.permute.xlu0 %841
        %843 = vrot.lane.b32.xlu0 %v835, 127
        %v844 = vpop.permute.xlu0 %843
        %845 = vrot.lane.b32.xlu0 %v837, 127
        %v846 = vpop.permute.xlu0 %845
        %847 = vrot.lane.b32.xlu0 %v839, 127
        %v848 = vpop.permute.xlu0 %847
        %849 = vrot.lane.b32.xlu0 %v834, 127
        %v850 = vpop.permute.xlu0 %849
        %851 = vrot.lane.b32.xlu0 %v836, 127
        %v852 = vpop.permute.xlu0 %851
        %853 = vrot.lane.b32.xlu0 %v838, 127
        %v854 = vpop.permute.xlu0 %853
        %855 = vrot.lane.b32.xlu0 %v840, 127
        %v856 = vpop.permute.xlu0 %855
        %v857 = vsel %vm497, %v842, %v850
        %v858 = vsel %vm497, %v844, %v852
        %v859 = vsel %vm497, %v846, %v854
        %v860 = vsel %vm497, %v848, %v856
        %v861 = vsel %vm497, %v850, %v842
        %v862 = vsel %vm497, %v852, %v844
        %v863 = vsel %vm497, %v854, %v846
        %v864 = vsel %vm497, %v856, %v848
        %v865 = vsel %vm508, %v857, -3e+38
        %v866 = vsel %vm509, %v861, -3e+38
        %v867 = vsel %vm508, %v858, -3e+38
        %v868 = vsel %vm509, %v862, -3e+38
        %v869 = vsel %vm508, %v859, -3e+38
        %v870 = vsel %vm509, %v863, -3e+38
        %v871 = vsel %vm508, %v860, -3e+38
        %v872 = vsel %vm509, %v864, -3e+38
        %v873 = vmax.f32 %v833, %v865
        %v874 = vmax.f32 %v834, %v866
        %v875 = vmax.f32 %v835, %v867
        %v876 = vmax.f32 %v836, %v868
        %v877 = vmax.f32 %v837, %v869
        %v878 = vmax.f32 %v838, %v870
        %v879 = vmax.f32 %v839, %v871
        %v880 = vmax.f32 %v840, %v872
        %881 = vrot.lane.b32.xlu0 %v833, 126
        %v882 = vpop.permute.xlu0 %881
        %883 = vrot.lane.b32.xlu0 %v835, 126
        %v884 = vpop.permute.xlu0 %883
        %885 = vrot.lane.b32.xlu0 %v837, 126
        %v886 = vpop.permute.xlu0 %885
        %887 = vrot.lane.b32.xlu0 %v839, 126
        %v888 = vpop.permute.xlu0 %887
        %889 = vrot.lane.b32.xlu0 %v834, 126
        %v890 = vpop.permute.xlu0 %889
        %891 = vrot.lane.b32.xlu0 %v836, 126
        %v892 = vpop.permute.xlu0 %891
        %893 = vrot.lane.b32.xlu0 %v838, 126
        %v894 = vpop.permute.xlu0 %893
        %895 = vrot.lane.b32.xlu0 %v840, 126
        %v896 = vpop.permute.xlu0 %895
        %v897 = vsel %vm542, %v882, %v890
        %v898 = vsel %vm542, %v884, %v892
        %v899 = vsel %vm542, %v886, %v894
        %v900 = vsel %vm542, %v888, %v896
        %v901 = vsel %vm542, %v890, %v882
        %v902 = vsel %vm542, %v892, %v884
        %v903 = vsel %vm542, %v894, %v886
        %v904 = vsel %vm542, %v896, %v888
        %v905 = vsel %vm553, %v897, -3e+38
        %v906 = vsel %vm554, %v901, -3e+38
        %v907 = vsel %vm553, %v898, -3e+38
        %v908 = vsel %vm554, %v902, -3e+38
        %v909 = vsel %vm553, %v899, -3e+38
        %v910 = vsel %vm554, %v903, -3e+38
        %v911 = vsel %vm553, %v900, -3e+38
        %v912 = vsel %vm554, %v904, -3e+38
        %v913 = vmax.f32 %v873, %v905
        %v914 = vmax.f32 %v874, %v906
        %v915 = vmax.f32 %v875, %v907
        %v916 = vmax.f32 %v876, %v908
        %v917 = vmax.f32 %v877, %v909
        %v918 = vmax.f32 %v878, %v910
        %v919 = vmax.f32 %v879, %v911
        %v920 = vmax.f32 %v880, %v912
        %921 = vrot.lane.b32.xlu0 %v833, 1
        %v922 = vpop.permute.xlu0 %921
        %923 = vrot.lane.b32.xlu0 %v835, 1
        %v924 = vpop.permute.xlu0 %923
        %925 = vrot.lane.b32.xlu0 %v837, 1
        %v926 = vpop.permute.xlu0 %925
        %927 = vrot.lane.b32.xlu0 %v839, 1
        %v928 = vpop.permute.xlu0 %927
        %929 = vrot.lane.b32.xlu0 %v834, 1
        %v930 = vpop.permute.xlu0 %929
        %931 = vrot.lane.b32.xlu0 %v836, 1
        %v932 = vpop.permute.xlu0 %931
        %933 = vrot.lane.b32.xlu0 %v838, 1
        %v934 = vpop.permute.xlu0 %933
        %935 = vrot.lane.b32.xlu0 %v840, 1
        %v936 = vpop.permute.xlu0 %935
        %v937 = vsel %vm587, %v922, %v930
        %v938 = vsel %vm587, %v924, %v932
        %v939 = vsel %vm587, %v926, %v934
        %v940 = vsel %vm587, %v928, %v936
        %v941 = vsel %vm587, %v930, %v922
        %v942 = vsel %vm587, %v932, %v924
        %v943 = vsel %vm587, %v934, %v926
        %v944 = vsel %vm587, %v936, %v928
        %v945 = vsel %vm598, %v941, -3e+38
        %v946 = vsel %vm599, %v937, -3e+38
        %v947 = vsel %vm598, %v942, -3e+38
        %v948 = vsel %vm599, %v938, -3e+38
        %v949 = vsel %vm598, %v943, -3e+38
        %v950 = vsel %vm599, %v939, -3e+38
        %v951 = vsel %vm598, %v944, -3e+38
        %v952 = vsel %vm599, %v940, -3e+38
        %v953 = vmax.f32 %v913, %v945
        %v954 = vmax.f32 %v914, %v946
        %v955 = vmax.f32 %v915, %v947
        %v956 = vmax.f32 %v916, %v948
        %v957 = vmax.f32 %v917, %v949
        %v958 = vmax.f32 %v918, %v950
        %v959 = vmax.f32 %v919, %v951
        %v960 = vmax.f32 %v920, %v952
        %961 = vrot.lane.b32.xlu0 %v833, 2
        %v962 = vpop.permute.xlu0 %961
        %963 = vrot.lane.b32.xlu0 %v835, 2
        %v964 = vpop.permute.xlu0 %963
        %965 = vrot.lane.b32.xlu0 %v837, 2
        %v966 = vpop.permute.xlu0 %965
        %967 = vrot.lane.b32.xlu0 %v839, 2
        %v968 = vpop.permute.xlu0 %967
        %969 = vrot.lane.b32.xlu0 %v834, 2
        %v970 = vpop.permute.xlu0 %969
        %971 = vrot.lane.b32.xlu0 %v836, 2
        %v972 = vpop.permute.xlu0 %971
        %973 = vrot.lane.b32.xlu0 %v838, 2
        %v974 = vpop.permute.xlu0 %973
        %975 = vrot.lane.b32.xlu0 %v840, 2
        %v976 = vpop.permute.xlu0 %975
        %v977 = vsel %vm632, %v962, %v970
        %v978 = vsel %vm632, %v964, %v972
        %v979 = vsel %vm632, %v966, %v974
        %v980 = vsel %vm632, %v968, %v976
        %v981 = vsel %vm632, %v970, %v962
        %v982 = vsel %vm632, %v972, %v964
        %v983 = vsel %vm632, %v974, %v966
        %v984 = vsel %vm632, %v976, %v968
        %v985 = vsel %vm643, %v981, -3e+38
        %v986 = vsel %vm644, %v977, -3e+38
        %v987 = vsel %vm643, %v982, -3e+38
        %v988 = vsel %vm644, %v978, -3e+38
        %v989 = vsel %vm643, %v983, -3e+38
        %v990 = vsel %vm644, %v979, -3e+38
        %v991 = vsel %vm643, %v984, -3e+38
        %v992 = vsel %vm644, %v980, -3e+38
        %v993 = vmax.f32 %v953, %v985
        %v994 = vmax.f32 %v954, %v986
        %v995 = vmax.f32 %v955, %v987
        %v996 = vmax.f32 %v956, %v988
        %v997 = vmax.f32 %v957, %v989
        %v998 = vmax.f32 %v958, %v990
        %v999 = vmax.f32 %v959, %v991
        %v1000 = vmax.f32 %v960, %v992
        %1001 = vrot.lane.b32.xlu0 %v993, 112
        %v1002 = vpop.permute.xlu0 %1001
        %1003 = vrot.lane.b32.xlu0 %v995, 112
        %v1004 = vpop.permute.xlu0 %1003
        %1005 = vrot.lane.b32.xlu0 %v997, 112
        %v1006 = vpop.permute.xlu0 %1005
        %1007 = vrot.lane.b32.xlu0 %v999, 112
        %v1008 = vpop.permute.xlu0 %1007
        %1009 = vrot.lane.b32.xlu0 %v994, 112
        %v1010 = vpop.permute.xlu0 %1009
        %1011 = vrot.lane.b32.xlu0 %v996, 112
        %v1012 = vpop.permute.xlu0 %1011
        %1013 = vrot.lane.b32.xlu0 %v998, 112
        %v1014 = vpop.permute.xlu0 %1013
        %1015 = vrot.lane.b32.xlu0 %v1000, 112
        %v1016 = vpop.permute.xlu0 %1015
        %v1017 = vsel %vm677, %v1002, %v1010
        %v1018 = vsel %vm677, %v1004, %v1012
        %v1019 = vsel %vm677, %v1006, %v1014
        %v1020 = vsel %vm677, %v1008, %v1016
        %v1021 = vsel %vm677, %v1010, %v1002
        %v1022 = vsel %vm677, %v1012, %v1004
        %v1023 = vsel %vm677, %v1014, %v1006
        %v1024 = vsel %vm677, %v1016, %v1008
        %v1025 = vsel %vm688, %v1017, -3e+38
        %v1026 = vsel %vm689, %v1021, -3e+38
        %v1027 = vsel %vm688, %v1018, -3e+38
        %v1028 = vsel %vm689, %v1022, -3e+38
        %v1029 = vsel %vm688, %v1019, -3e+38
        %v1030 = vsel %vm689, %v1023, -3e+38
        %v1031 = vsel %vm688, %v1020, -3e+38
        %v1032 = vsel %vm689, %v1024, -3e+38
        %v1033 = vmax.f32 %v993, %v1025
        %v1034 = vmax.f32 %v994, %v1026
        %v1035 = vmax.f32 %v995, %v1027
        %v1036 = vmax.f32 %v996, %v1028
        %v1037 = vmax.f32 %v997, %v1029
        %v1038 = vmax.f32 %v998, %v1030
        %v1039 = vmax.f32 %v999, %v1031
        %v1040 = vmax.f32 %v1000, %v1032
        %1041 = vrot.lane.b32.xlu0 %v993, 96
        %v1042 = vpop.permute.xlu0 %1041
        %1043 = vrot.lane.b32.xlu0 %v995, 96
        %v1044 = vpop.permute.xlu0 %1043
        %1045 = vrot.lane.b32.xlu0 %v997, 96
        %v1046 = vpop.permute.xlu0 %1045
        %1047 = vrot.lane.b32.xlu0 %v999, 96
        %v1048 = vpop.permute.xlu0 %1047
        %1049 = vrot.lane.b32.xlu0 %v994, 96
        %v1050 = vpop.permute.xlu0 %1049
        %1051 = vrot.lane.b32.xlu0 %v996, 96
        %v1052 = vpop.permute.xlu0 %1051
        %1053 = vrot.lane.b32.xlu0 %v998, 96
        %v1054 = vpop.permute.xlu0 %1053
        %1055 = vrot.lane.b32.xlu0 %v1000, 96
        %v1056 = vpop.permute.xlu0 %1055
        %v1057 = vsel %vm722, %v1042, %v1050
        %v1058 = vsel %vm722, %v1044, %v1052
        %v1059 = vsel %vm722, %v1046, %v1054
        %v1060 = vsel %vm722, %v1048, %v1056
        %v1061 = vsel %vm722, %v1050, %v1042
        %v1062 = vsel %vm722, %v1052, %v1044
        %v1063 = vsel %vm722, %v1054, %v1046
        %v1064 = vsel %vm722, %v1056, %v1048
        %v1065 = vsel %vm733, %v1057, -3e+38
        %v1066 = vsel %vm734, %v1061, -3e+38
        %v1067 = vsel %vm733, %v1058, -3e+38
        %v1068 = vsel %vm734, %v1062, -3e+38
        %v1069 = vsel %vm733, %v1059, -3e+38
        %v1070 = vsel %vm734, %v1063, -3e+38
        %v1071 = vsel %vm733, %v1060, -3e+38
        %v1072 = vsel %vm734, %v1064, -3e+38
        %v1073 = vmax.f32 %v1033, %v1065
        %v1074 = vmax.f32 %v1034, %v1066
        %v1075 = vmax.f32 %v1035, %v1067
        %v1076 = vmax.f32 %v1036, %v1068
        %v1077 = vmax.f32 %v1037, %v1069
        %v1078 = vmax.f32 %v1038, %v1070
        %v1079 = vmax.f32 %v1039, %v1071
        %v1080 = vmax.f32 %v1040, %v1072
        %1081 = vrot.lane.b32.xlu0 %v993, 16
        %v1082 = vpop.permute.xlu0 %1081
        %1083 = vrot.lane.b32.xlu0 %v995, 16
        %v1084 = vpop.permute.xlu0 %1083
        %1085 = vrot.lane.b32.xlu0 %v997, 16
        %v1086 = vpop.permute.xlu0 %1085
        %1087 = vrot.lane.b32.xlu0 %v999, 16
        %v1088 = vpop.permute.xlu0 %1087
        %1089 = vrot.lane.b32.xlu0 %v994, 16
        %v1090 = vpop.permute.xlu0 %1089
        %1091 = vrot.lane.b32.xlu0 %v996, 16
        %v1092 = vpop.permute.xlu0 %1091
        %1093 = vrot.lane.b32.xlu0 %v998, 16
        %v1094 = vpop.permute.xlu0 %1093
        %1095 = vrot.lane.b32.xlu0 %v1000, 16
        %v1096 = vpop.permute.xlu0 %1095
        %v1097 = vsel %vm767, %v1082, %v1090
        %v1098 = vsel %vm767, %v1084, %v1092
        %v1099 = vsel %vm767, %v1086, %v1094
        %v1100 = vsel %vm767, %v1088, %v1096
        %v1101 = vsel %vm767, %v1090, %v1082
        %v1102 = vsel %vm767, %v1092, %v1084
        %v1103 = vsel %vm767, %v1094, %v1086
        %v1104 = vsel %vm767, %v1096, %v1088
        %v1105 = vsel %vm778, %v1101, -3e+38
        %v1106 = vsel %vm779, %v1097, -3e+38
        %v1107 = vsel %vm778, %v1102, -3e+38
        %v1108 = vsel %vm779, %v1098, -3e+38
        %v1109 = vsel %vm778, %v1103, -3e+38
        %v1110 = vsel %vm779, %v1099, -3e+38
        %v1111 = vsel %vm778, %v1104, -3e+38
        %v1112 = vsel %vm779, %v1100, -3e+38
        %v1113 = vmax.f32 %v1073, %v1105
        %v1114 = vmax.f32 %v1074, %v1106
        %v1115 = vmax.f32 %v1075, %v1107
        %v1116 = vmax.f32 %v1076, %v1108
        %v1117 = vmax.f32 %v1077, %v1109
        %v1118 = vmax.f32 %v1078, %v1110
        %v1119 = vmax.f32 %v1079, %v1111
        %v1120 = vmax.f32 %v1080, %v1112
        %1121 = vrot.lane.b32.xlu0 %v993, 32
        %v1122 = vpop.permute.xlu0 %1121
        %1123 = vrot.lane.b32.xlu0 %v995, 32
        %v1124 = vpop.permute.xlu0 %1123
        %1125 = vrot.lane.b32.xlu0 %v997, 32
        %v1126 = vpop.permute.xlu0 %1125
        %1127 = vrot.lane.b32.xlu0 %v999, 32
        %v1128 = vpop.permute.xlu0 %1127
        %1129 = vrot.lane.b32.xlu0 %v994, 32
        %v1130 = vpop.permute.xlu0 %1129
        %1131 = vrot.lane.b32.xlu0 %v996, 32
        %v1132 = vpop.permute.xlu0 %1131
        %1133 = vrot.lane.b32.xlu0 %v998, 32
        %v1134 = vpop.permute.xlu0 %1133
        %1135 = vrot.lane.b32.xlu0 %v1000, 32
        %v1136 = vpop.permute.xlu0 %1135
        %v1137 = vsel %vm812, %v1122, %v1130
        %v1138 = vsel %vm812, %v1124, %v1132
        %v1139 = vsel %vm812, %v1126, %v1134
        %v1140 = vsel %vm812, %v1128, %v1136
        %v1141 = vsel %vm812, %v1130, %v1122
        %v1142 = vsel %vm812, %v1132, %v1124
        %v1143 = vsel %vm812, %v1134, %v1126
        %v1144 = vsel %vm812, %v1136, %v1128
        %v1145 = vsel %vm823, %v1141, -3e+38
        %v1146 = vsel %vm824, %v1137, -3e+38
        %v1147 = vsel %vm823, %v1142, -3e+38
        %v1148 = vsel %vm824, %v1138, -3e+38
        %v1149 = vsel %vm823, %v1143, -3e+38
        %v1150 = vsel %vm824, %v1139, -3e+38
        %v1151 = vsel %vm823, %v1144, -3e+38
        %v1152 = vsel %vm824, %v1140, -3e+38
        %v1153 = vmax.f32 %v1113, %v1145
        %v1154 = vmax.f32 %v1114, %v1146
        %v1155 = vmax.f32 %v1115, %v1147
        %v1156 = vmax.f32 %v1116, %v1148
        %v1157 = vmax.f32 %v1117, %v1149
        %v1158 = vmax.f32 %v1118, %v1150
        %v1159 = vmax.f32 %v1119, %v1151
        %v1160 = vmax.f32 %v1120, %v1152
        %1161 = vrot.lane.b32.xlu0 %v1153, 127
        %v1162 = vpop.permute.xlu0 %1161
        %1163 = vrot.lane.b32.xlu0 %v1155, 127
        %v1164 = vpop.permute.xlu0 %1163
        %1165 = vrot.lane.b32.xlu0 %v1157, 127
        %v1166 = vpop.permute.xlu0 %1165
        %1167 = vrot.lane.b32.xlu0 %v1159, 127
        %v1168 = vpop.permute.xlu0 %1167
        %1169 = vrot.lane.b32.xlu0 %v1154, 127
        %v1170 = vpop.permute.xlu0 %1169
        %1171 = vrot.lane.b32.xlu0 %v1156, 127
        %v1172 = vpop.permute.xlu0 %1171
        %1173 = vrot.lane.b32.xlu0 %v1158, 127
        %v1174 = vpop.permute.xlu0 %1173
        %1175 = vrot.lane.b32.xlu0 %v1160, 127
        %v1176 = vpop.permute.xlu0 %1175
        %v1177 = vsel %vm497, %v1162, %v1170
        %v1178 = vsel %vm497, %v1164, %v1172
        %v1179 = vsel %vm497, %v1166, %v1174
        %v1180 = vsel %vm497, %v1168, %v1176
        %v1181 = vsel %vm497, %v1170, %v1162
        %v1182 = vsel %vm497, %v1172, %v1164
        %v1183 = vsel %vm497, %v1174, %v1166
        %v1184 = vsel %vm497, %v1176, %v1168
        %v1185 = vsel %vm508, %v1177, -3e+38
        %v1186 = vsel %vm509, %v1181, -3e+38
        %v1187 = vsel %vm508, %v1178, -3e+38
        %v1188 = vsel %vm509, %v1182, -3e+38
        %v1189 = vsel %vm508, %v1179, -3e+38
        %v1190 = vsel %vm509, %v1183, -3e+38
        %v1191 = vsel %vm508, %v1180, -3e+38
        %v1192 = vsel %vm509, %v1184, -3e+38
        %v1193 = vmax.f32 %v1153, %v1185
        %v1194 = vmax.f32 %v1154, %v1186
        %v1195 = vmax.f32 %v1155, %v1187
        %v1196 = vmax.f32 %v1156, %v1188
        %v1197 = vmax.f32 %v1157, %v1189
        %v1198 = vmax.f32 %v1158, %v1190
        %v1199 = vmax.f32 %v1159, %v1191
        %v1200 = vmax.f32 %v1160, %v1192
        %1201 = vrot.lane.b32.xlu0 %v1153, 126
        %v1202 = vpop.permute.xlu0 %1201
        %1203 = vrot.lane.b32.xlu0 %v1155, 126
        %v1204 = vpop.permute.xlu0 %1203
        %1205 = vrot.lane.b32.xlu0 %v1157, 126
        %v1206 = vpop.permute.xlu0 %1205
        %1207 = vrot.lane.b32.xlu0 %v1159, 126
        %v1208 = vpop.permute.xlu0 %1207
        %1209 = vrot.lane.b32.xlu0 %v1154, 126
        %v1210 = vpop.permute.xlu0 %1209
        %1211 = vrot.lane.b32.xlu0 %v1156, 126
        %v1212 = vpop.permute.xlu0 %1211
        %1213 = vrot.lane.b32.xlu0 %v1158, 126
        %v1214 = vpop.permute.xlu0 %1213
        %1215 = vrot.lane.b32.xlu0 %v1160, 126
        %v1216 = vpop.permute.xlu0 %1215
        %v1217 = vsel %vm542, %v1202, %v1210
        %v1218 = vsel %vm542, %v1204, %v1212
        %v1219 = vsel %vm542, %v1206, %v1214
        %v1220 = vsel %vm542, %v1208, %v1216
        %v1221 = vsel %vm542, %v1210, %v1202
        %v1222 = vsel %vm542, %v1212, %v1204
        %v1223 = vsel %vm542, %v1214, %v1206
        %v1224 = vsel %vm542, %v1216, %v1208
        %v1225 = vsel %vm553, %v1217, -3e+38
        %v1226 = vsel %vm554, %v1221, -3e+38
        %v1227 = vsel %vm553, %v1218, -3e+38
        %v1228 = vsel %vm554, %v1222, -3e+38
        %v1229 = vsel %vm553, %v1219, -3e+38
        %v1230 = vsel %vm554, %v1223, -3e+38
        %v1231 = vsel %vm553, %v1220, -3e+38
        %v1232 = vsel %vm554, %v1224, -3e+38
        %v1233 = vmax.f32 %v1193, %v1225
        %v1234 = vmax.f32 %v1194, %v1226
        %v1235 = vmax.f32 %v1195, %v1227
        %v1236 = vmax.f32 %v1196, %v1228
        %v1237 = vmax.f32 %v1197, %v1229
        %v1238 = vmax.f32 %v1198, %v1230
        %v1239 = vmax.f32 %v1199, %v1231
        %v1240 = vmax.f32 %v1200, %v1232
        %1241 = vrot.lane.b32.xlu0 %v1153, 1
        %v1242 = vpop.permute.xlu0 %1241
        %1243 = vrot.lane.b32.xlu0 %v1155, 1
        %v1244 = vpop.permute.xlu0 %1243
        %1245 = vrot.lane.b32.xlu0 %v1157, 1
        %v1246 = vpop.permute.xlu0 %1245
        %1247 = vrot.lane.b32.xlu0 %v1159, 1
        %v1248 = vpop.permute.xlu0 %1247
        %1249 = vrot.lane.b32.xlu0 %v1154, 1
        %v1250 = vpop.permute.xlu0 %1249
        %1251 = vrot.lane.b32.xlu0 %v1156, 1
        %v1252 = vpop.permute.xlu0 %1251
        %1253 = vrot.lane.b32.xlu0 %v1158, 1
        %v1254 = vpop.permute.xlu0 %1253
        %1255 = vrot.lane.b32.xlu0 %v1160, 1
        %v1256 = vpop.permute.xlu0 %1255
        %v1257 = vsel %vm587, %v1242, %v1250
        %v1258 = vsel %vm587, %v1244, %v1252
        %v1259 = vsel %vm587, %v1246, %v1254
        %v1260 = vsel %vm587, %v1248, %v1256
        %v1261 = vsel %vm587, %v1250, %v1242
        %v1262 = vsel %vm587, %v1252, %v1244
        %v1263 = vsel %vm587, %v1254, %v1246
        %v1264 = vsel %vm587, %v1256, %v1248
        %v1265 = vsel %vm598, %v1261, -3e+38
        %v1266 = vsel %vm599, %v1257, -3e+38
        %v1267 = vsel %vm598, %v1262, -3e+38
        %v1268 = vsel %vm599, %v1258, -3e+38
        %v1269 = vsel %vm598, %v1263, -3e+38
        %v1270 = vsel %vm599, %v1259, -3e+38
        %v1271 = vsel %vm598, %v1264, -3e+38
        %v1272 = vsel %vm599, %v1260, -3e+38
        %v1273 = vmax.f32 %v1233, %v1265
        %v1274 = vmax.f32 %v1234, %v1266
        %v1275 = vmax.f32 %v1235, %v1267
        %v1276 = vmax.f32 %v1236, %v1268
        %v1277 = vmax.f32 %v1237, %v1269
        %v1278 = vmax.f32 %v1238, %v1270
        %v1279 = vmax.f32 %v1239, %v1271
        %v1280 = vmax.f32 %v1240, %v1272
        %1281 = vrot.lane.b32.xlu0 %v1153, 2
        %v1282 = vpop.permute.xlu0 %1281
        %1283 = vrot.lane.b32.xlu0 %v1155, 2
        %v1284 = vpop.permute.xlu0 %1283
        %1285 = vrot.lane.b32.xlu0 %v1157, 2
        %v1286 = vpop.permute.xlu0 %1285
        %1287 = vrot.lane.b32.xlu0 %v1159, 2
        %v1288 = vpop.permute.xlu0 %1287
        %1289 = vrot.lane.b32.xlu0 %v1154, 2
        %v1290 = vpop.permute.xlu0 %1289
        %1291 = vrot.lane.b32.xlu0 %v1156, 2
        %v1292 = vpop.permute.xlu0 %1291
        %1293 = vrot.lane.b32.xlu0 %v1158, 2
        %v1294 = vpop.permute.xlu0 %1293
        %1295 = vrot.lane.b32.xlu0 %v1160, 2
        %v1296 = vpop.permute.xlu0 %1295
        %v1297 = vsel %vm632, %v1282, %v1290
        %v1298 = vsel %vm632, %v1284, %v1292
        %v1299 = vsel %vm632, %v1286, %v1294
        %v1300 = vsel %vm632, %v1288, %v1296
        %v1301 = vsel %vm632, %v1290, %v1282
        %v1302 = vsel %vm632, %v1292, %v1284
        %v1303 = vsel %vm632, %v1294, %v1286
        %v1304 = vsel %vm632, %v1296, %v1288
        %v1305 = vsel %vm643, %v1301, -3e+38
        %v1306 = vsel %vm644, %v1297, -3e+38
        %v1307 = vsel %vm643, %v1302, -3e+38
        %v1308 = vsel %vm644, %v1298, -3e+38
        %v1309 = vsel %vm643, %v1303, -3e+38
        %v1310 = vsel %vm644, %v1299, -3e+38
        %v1311 = vsel %vm643, %v1304, -3e+38
        %v1312 = vsel %vm644, %v1300, -3e+38
        %v1313 = vmax.f32 %v1273, %v1305
        %v1314 = vmax.f32 %v1274, %v1306
        %v1315 = vmax.f32 %v1275, %v1307
        %v1316 = vmax.f32 %v1276, %v1308
        %v1317 = vmax.f32 %v1277, %v1309
        %v1318 = vmax.f32 %v1278, %v1310
        %v1319 = vmax.f32 %v1279, %v1311
        %v1320 = vmax.f32 %v1280, %v1312
        %1321 = vrot.lane.b32.xlu0 %v1313, 112
        %v1322 = vpop.permute.xlu0 %1321
        %1323 = vrot.lane.b32.xlu0 %v1315, 112
        %v1324 = vpop.permute.xlu0 %1323
        %1325 = vrot.lane.b32.xlu0 %v1317, 112
        %v1326 = vpop.permute.xlu0 %1325
        %1327 = vrot.lane.b32.xlu0 %v1319, 112
        %v1328 = vpop.permute.xlu0 %1327
        %1329 = vrot.lane.b32.xlu0 %v1314, 112
        %v1330 = vpop.permute.xlu0 %1329
        %1331 = vrot.lane.b32.xlu0 %v1316, 112
        %v1332 = vpop.permute.xlu0 %1331
        %1333 = vrot.lane.b32.xlu0 %v1318, 112
        %v1334 = vpop.permute.xlu0 %1333
        %1335 = vrot.lane.b32.xlu0 %v1320, 112
        %v1336 = vpop.permute.xlu0 %1335
        %v1337 = vsel %vm677, %v1322, %v1330
        %v1338 = vsel %vm677, %v1324, %v1332
        %v1339 = vsel %vm677, %v1326, %v1334
        %v1340 = vsel %vm677, %v1328, %v1336
        %v1341 = vsel %vm677, %v1330, %v1322
        %v1342 = vsel %vm677, %v1332, %v1324
        %v1343 = vsel %vm677, %v1334, %v1326
        %v1344 = vsel %vm677, %v1336, %v1328
        %v1345 = vsel %vm688, %v1337, -3e+38
        %v1346 = vsel %vm689, %v1341, -3e+38
        %v1347 = vsel %vm688, %v1338, -3e+38
        %v1348 = vsel %vm689, %v1342, -3e+38
        %v1349 = vsel %vm688, %v1339, -3e+38
        %v1350 = vsel %vm689, %v1343, -3e+38
        %v1351 = vsel %vm688, %v1340, -3e+38
        %v1352 = vsel %vm689, %v1344, -3e+38
        %v1353 = vmax.f32 %v1313, %v1345
        %v1354 = vmax.f32 %v1314, %v1346
        %v1355 = vmax.f32 %v1315, %v1347
        %v1356 = vmax.f32 %v1316, %v1348
        %v1357 = vmax.f32 %v1317, %v1349
        %v1358 = vmax.f32 %v1318, %v1350
        %v1359 = vmax.f32 %v1319, %v1351
        %v1360 = vmax.f32 %v1320, %v1352
        %1361 = vrot.lane.b32.xlu0 %v1313, 96
        %v1362 = vpop.permute.xlu0 %1361
        %1363 = vrot.lane.b32.xlu0 %v1315, 96
        %v1364 = vpop.permute.xlu0 %1363
        %1365 = vrot.lane.b32.xlu0 %v1317, 96
        %v1366 = vpop.permute.xlu0 %1365
        %1367 = vrot.lane.b32.xlu0 %v1319, 96
        %v1368 = vpop.permute.xlu0 %1367
        %1369 = vrot.lane.b32.xlu0 %v1314, 96
        %v1370 = vpop.permute.xlu0 %1369
        %1371 = vrot.lane.b32.xlu0 %v1316, 96
        %v1372 = vpop.permute.xlu0 %1371
        %1373 = vrot.lane.b32.xlu0 %v1318, 96
        %v1374 = vpop.permute.xlu0 %1373
        %1375 = vrot.lane.b32.xlu0 %v1320, 96
        %v1376 = vpop.permute.xlu0 %1375
        %v1377 = vsel %vm722, %v1362, %v1370
        %v1378 = vsel %vm722, %v1364, %v1372
        %v1379 = vsel %vm722, %v1366, %v1374
        %v1380 = vsel %vm722, %v1368, %v1376
        %v1381 = vsel %vm722, %v1370, %v1362
        %v1382 = vsel %vm722, %v1372, %v1364
        %v1383 = vsel %vm722, %v1374, %v1366
        %v1384 = vsel %vm722, %v1376, %v1368
        %v1385 = vsel %vm733, %v1377, -3e+38
        %v1386 = vsel %vm734, %v1381, -3e+38
        %v1387 = vsel %vm733, %v1378, -3e+38
        %v1388 = vsel %vm734, %v1382, -3e+38
        %v1389 = vsel %vm733, %v1379, -3e+38
        %v1390 = vsel %vm734, %v1383, -3e+38
        %v1391 = vsel %vm733, %v1380, -3e+38
        %v1392 = vsel %vm734, %v1384, -3e+38
        %v1393 = vmax.f32 %v1353, %v1385
        %v1394 = vmax.f32 %v1354, %v1386
        %v1395 = vmax.f32 %v1355, %v1387
        %v1396 = vmax.f32 %v1356, %v1388
        %v1397 = vmax.f32 %v1357, %v1389
        %v1398 = vmax.f32 %v1358, %v1390
        %v1399 = vmax.f32 %v1359, %v1391
        %v1400 = vmax.f32 %v1360, %v1392
        %1401 = vrot.lane.b32.xlu0 %v1313, 16
        %v1402 = vpop.permute.xlu0 %1401
        %1403 = vrot.lane.b32.xlu0 %v1315, 16
        %v1404 = vpop.permute.xlu0 %1403
        %1405 = vrot.lane.b32.xlu0 %v1317, 16
        %v1406 = vpop.permute.xlu0 %1405
        %1407 = vrot.lane.b32.xlu0 %v1319, 16
        %v1408 = vpop.permute.xlu0 %1407
        %1409 = vrot.lane.b32.xlu0 %v1314, 16
        %v1410 = vpop.permute.xlu0 %1409
        %1411 = vrot.lane.b32.xlu0 %v1316, 16
        %v1412 = vpop.permute.xlu0 %1411
        %1413 = vrot.lane.b32.xlu0 %v1318, 16
        %v1414 = vpop.permute.xlu0 %1413
        %1415 = vrot.lane.b32.xlu0 %v1320, 16
        %v1416 = vpop.permute.xlu0 %1415
        %v1417 = vsel %vm767, %v1402, %v1410
        %v1418 = vsel %vm767, %v1404, %v1412
        %v1419 = vsel %vm767, %v1406, %v1414
        %v1420 = vsel %vm767, %v1408, %v1416
        %v1421 = vsel %vm767, %v1410, %v1402
        %v1422 = vsel %vm767, %v1412, %v1404
        %v1423 = vsel %vm767, %v1414, %v1406
        %v1424 = vsel %vm767, %v1416, %v1408
        %v1425 = vsel %vm778, %v1421, -3e+38
        %v1426 = vsel %vm779, %v1417, -3e+38
        %v1427 = vsel %vm778, %v1422, -3e+38
        %v1428 = vsel %vm779, %v1418, -3e+38
        %v1429 = vsel %vm778, %v1423, -3e+38
        %v1430 = vsel %vm779, %v1419, -3e+38
        %v1431 = vsel %vm778, %v1424, -3e+38
        %v1432 = vsel %vm779, %v1420, -3e+38
        %v1433 = vmax.f32 %v1393, %v1425
        %v1434 = vmax.f32 %v1394, %v1426
        %v1435 = vmax.f32 %v1395, %v1427
        %v1436 = vmax.f32 %v1396, %v1428
        %v1437 = vmax.f32 %v1397, %v1429
        %v1438 = vmax.f32 %v1398, %v1430
        %v1439 = vmax.f32 %v1399, %v1431
        %v1440 = vmax.f32 %v1400, %v1432
        %1441 = vrot.lane.b32.xlu0 %v1313, 32
        %v1442 = vpop.permute.xlu0 %1441
        %1443 = vrot.lane.b32.xlu0 %v1315, 32
        %v1444 = vpop.permute.xlu0 %1443
        %1445 = vrot.lane.b32.xlu0 %v1317, 32
        %v1446 = vpop.permute.xlu0 %1445
        %1447 = vrot.lane.b32.xlu0 %v1319, 32
        %v1448 = vpop.permute.xlu0 %1447
        %1449 = vrot.lane.b32.xlu0 %v1314, 32
        %v1450 = vpop.permute.xlu0 %1449
        %1451 = vrot.lane.b32.xlu0 %v1316, 32
        %v1452 = vpop.permute.xlu0 %1451
        %1453 = vrot.lane.b32.xlu0 %v1318, 32
        %v1454 = vpop.permute.xlu0 %1453
        %1455 = vrot.lane.b32.xlu0 %v1320, 32
        %v1456 = vpop.permute.xlu0 %1455
        %v1457 = vsel %vm812, %v1442, %v1450
        %v1458 = vsel %vm812, %v1444, %v1452
        %v1459 = vsel %vm812, %v1446, %v1454
        %v1460 = vsel %vm812, %v1448, %v1456
        %v1461 = vsel %vm812, %v1450, %v1442
        %v1462 = vsel %vm812, %v1452, %v1444
        %v1463 = vsel %vm812, %v1454, %v1446
        %v1464 = vsel %vm812, %v1456, %v1448
        %v1465 = vsel %vm823, %v1461, -3e+38
        %v1466 = vsel %vm824, %v1457, -3e+38
        %v1467 = vsel %vm823, %v1462, -3e+38
        %v1468 = vsel %vm824, %v1458, -3e+38
        %v1469 = vsel %vm823, %v1463, -3e+38
        %v1470 = vsel %vm824, %v1459, -3e+38
        %v1471 = vsel %vm823, %v1464, -3e+38
        %v1472 = vsel %vm824, %v1460, -3e+38
        %v1473 = vmax.f32 %v1433, %v1465
        %v1474 = vmax.f32 %v1434, %v1466
        %v1475 = vmax.f32 %v1435, %v1467
        %v1476 = vmax.f32 %v1436, %v1468
        %v1477 = vmax.f32 %v1437, %v1469
        %v1478 = vmax.f32 %v1438, %v1470
        %v1479 = vmax.f32 %v1439, %v1471
        %v1480 = vmax.f32 %v1440, %v1472
        %v1481 = vpack.c.bf16 %v432, %v430
        %v1482 = vpack.c.bf16 %v433, %v431
        %v1483 = vpack.c.bf16 %v436, %v434
        %v1484 = vpack.c.bf16 %v437, %v435
        %v1485 = vpack.c.bf16 %v835, %v833
        %v1486 = vpack.c.bf16 %v836, %v834
        %v1487 = vpack.c.bf16 %v839, %v837
        %v1488 = vpack.c.bf16 %v840, %v838
        %v1489 = vpack.c.bf16 %v1155, %v1153
        %v1490 = vpack.c.bf16 %v1156, %v1154
        %v1491 = vpack.c.bf16 %v1159, %v1157
        %v1492 = vpack.c.bf16 %v1160, %v1158
        %v1493 = vpack.c.bf16 %v1475, %v1473
        %v1494 = vpack.c.bf16 %v1476, %v1474
        %v1495 = vpack.c.bf16 %v1479, %v1477
        %v1496 = vpack.c.bf16 %v1480, %v1478
        %v1497 = vld [vmem:[%s3] sm:$0xf]
        %v1498 = vld [vmem:[%s3 + $0x4] sm:$0xf]
        %v1499 = vld [vmem:[%s3 + $0x8] sm:$0xf]
        %v1500 = vld [vmem:[%s3 + $0xc] sm:$0xf]
        %v1501 = vld [vmem:[%s3 + $0x10] sm:$0xf]
        %v1502 = vld [vmem:[%s3 + $0x14] sm:$0xf]
        %v1503 = vld [vmem:[%s3 + $0x18] sm:$0xf]
        %v1504 = vld [vmem:[%s3 + $0x1c] sm:$0xf]
        %v1505 = vld [vmem:[%s4] sm:$0xff]
        %v1506 = vld [vmem:[%s4 + $0x8] sm:$0xff]
        %v1507 = vld [vmem:[%s4 + $0x10] sm:$0xff]
        %v1508 = vld [vmem:[%s4 + $0x18] sm:$0xff]
        %v1509 = vld [vmem:[%s4 + $0x20] sm:$0xff]
        %v1510 = vld [vmem:[%s4 + $0x28] sm:$0xff]
        %v1511 = vld [vmem:[%s4 + $0x30] sm:$0xff]
        %v1512 = vld [vmem:[%s4 + $0x38] sm:$0xff]
        %1514 = vset.pattern.permute.xlu0 0
        %1515 = vperm.xlu0 %1514, %v1505
        %v1516 = vpop.permute.xlu0 %1515
        %1519 = vset.pattern.permute.xlu0 0
        %1520 = vperm.xlu0 %1519, %v1506
        %v1521 = vpop.permute.xlu0 %1520
        %1524 = vset.pattern.permute.xlu0 0
        %1525 = vperm.xlu0 %1524, %v1507
        %v1526 = vpop.permute.xlu0 %1525
        %1529 = vset.pattern.permute.xlu0 0
        %1530 = vperm.xlu0 %1529, %v1508
        %v1531 = vpop.permute.xlu0 %1530
        %1534 = vset.pattern.permute.xlu0 0
        %1535 = vperm.xlu0 %1534, %v1509
        %v1536 = vpop.permute.xlu0 %1535
        %1539 = vset.pattern.permute.xlu0 0
        %1540 = vperm.xlu0 %1539, %v1510
        %v1541 = vpop.permute.xlu0 %1540
        %1544 = vset.pattern.permute.xlu0 0
        %1545 = vperm.xlu0 %1544, %v1511
        %v1546 = vpop.permute.xlu0 %1545
        %1549 = vset.pattern.permute.xlu0 0
        %1550 = vperm.xlu0 %1549, %v1512
        %v1551 = vpop.permute.xlu0 %1550
        %v1561 = vunpack.c.l.b16 %v1497
        %v1562 = vunpack.c.l.b16 %v1498
        %v1563 = vunpack.c.l.b16 %v1499
        %v1564 = vunpack.c.l.b16 %v1500
        %v1565 = vunpack.c.l.b16 %v1501
        %v1566 = vunpack.c.l.b16 %v1502
        %v1567 = vunpack.c.l.b16 %v1503
        %v1568 = vunpack.c.l.b16 %v1504
        %v1569 = vpack.c.b16 %v1562, %v1561
        %v1570 = vpack.c.b16 %v1564, %v1563
        %v1571 = vpack.c.b16 %v1566, %v1565
        %v1572 = vpack.c.b16 %v1568, %v1567
        %1577 = vmatprep.subr.bf16.mxu0 %v1482
        %1578 = vmatpush1.bf16.msra.mxu0 %v1481
        %1579 = vmatprep.subr.bf16.mxu0 %v1484
        %1580 = vmatpush1.bf16.msra.mxu0 %v1483
        %1581 = vmatprep.subr.bf16.mxu0 %v1486
        %1582 = vmatpush1.bf16.msra.mxu0 %v1485
        %1583 = vmatprep.subr.bf16.mxu0 %v1488
        %1584 = vmatpush1.bf16.msra.mxu0 %v1487
        %1585 = vmatprep.subr.bf16.mxu0 %v1490
        %1586 = vmatpush1.bf16.msra.mxu0 %v1489
        %1587 = vmatprep.subr.bf16.mxu0 %v1492
        %1588 = vmatpush1.bf16.msra.mxu0 %v1491
        %1589 = vmatprep.subr.bf16.mxu0 %v1494
        %1590 = vmatpush1.bf16.msra.mxu0 %v1493
        %1591 = vmatprep.subr.bf16.mxu0 %v1496
        %1592 = vmatpush1.bf16.msra.mxu0 %v1495
        %1593 = vmatprep.subr.bf16.mxu0 0
        %1594 = vmatpush1.bf16.msra.mxu0 0
        %1595 = vmatprep.subr.bf16.mxu0 0
        %1596 = vmatpush1.bf16.msra.mxu0 0
        %1597 = vmatprep.subr.bf16.mxu0 0
        %1598 = vmatpush1.bf16.msra.mxu0 0
        %1599 = vmatprep.subr.bf16.mxu0 0
        %1600 = vmatpush1.bf16.msra.mxu0 0
        %1601 = vmatprep.subr.bf16.mxu0 0
        %1602 = vmatpush1.bf16.msra.mxu0 0
        %1603 = vmatprep.subr.bf16.mxu0 0
        %1604 = vmatpush1.bf16.msra.mxu0 0
        %1605 = vmatprep.subr.bf16.mxu0 0
        %1606 = vmatpush1.bf16.msra.mxu0 0
        %1607 = vmatprep.subr.bf16.mxu0 0
        %1608 = vmatpush1.bf16.msra.mxu0 0
        %1609 = vmatprep.mubr.bf16.mxu0 0
        %1610 = vmatmul.mubr.bf16.gmra.mrb[0].mxu0 %v1569
        %v1611 = vpop.f32.mrb[0].mxu0
        %v1612 = vadd.f32 %v1516, %v1611
        %v1613 = vpop.f32.mrb[0].mxu0
        %v1614 = vadd.f32 %v1516, %v1613
        %v1615 = vpop.f32.mrb[0].mxu0
        %v1616 = vadd.f32 %v1521, %v1615
        %v1617 = vpop.f32.mrb[0].mxu0
        %v1618 = vadd.f32 %v1521, %v1617
        %1619 = vmatprep.mubr.bf16.mxu0 0
        %1620 = vmatmul.mubr.bf16.gmra.mrb[0].mxu0 %v1570
        %v1621 = vpop.f32.mrb[0].mxu0
        %v1622 = vadd.f32 %v1526, %v1621
        %v1623 = vpop.f32.mrb[0].mxu0
        %v1624 = vadd.f32 %v1526, %v1623
        %v1625 = vpop.f32.mrb[0].mxu0
        %v1626 = vadd.f32 %v1531, %v1625
        %v1627 = vpop.f32.mrb[0].mxu0
        %v1628 = vadd.f32 %v1531, %v1627
        %1629 = vmatprep.mubr.bf16.mxu0 0
        %1630 = vmatmul.mubr.bf16.gmra.mrb[0].mxu0 %v1571
        %v1631 = vpop.f32.mrb[0].mxu0
        %v1632 = vadd.f32 %v1536, %v1631
        %v1633 = vpop.f32.mrb[0].mxu0
        %v1634 = vadd.f32 %v1536, %v1633
        %v1635 = vpop.f32.mrb[0].mxu0
        %v1636 = vadd.f32 %v1541, %v1635
        %v1637 = vpop.f32.mrb[0].mxu0
        %v1638 = vadd.f32 %v1541, %v1637
        %1639 = vmatprep.mubr.bf16.mxu0 0
        %1640 = vmatmul.mubr.bf16.gmra.mrb[0].mxu0 %v1572
        %v1641 = vpop.f32.mrb[0].mxu0
        %v1642 = vadd.f32 %v1546, %v1641
        %v1643 = vpop.f32.mrb[0].mxu0
        %v1644 = vadd.f32 %v1546, %v1643
        %v1645 = vpop.f32.mrb[0].mxu0
        %v1646 = vadd.f32 %v1551, %v1645
        %v1647 = vpop.f32.mrb[0].mxu0
        %v1648 = vadd.f32 %v1551, %v1647
        %1649 = vdwg.mxu0
        %v1650 = vsub.f32 0.0, %v1612
        %v1651 = vsub.f32 0.0, %v1614
        %v1652 = vsub.f32 0.0, %v1616
        %v1653 = vsub.f32 0.0, %v1618
        %v1654 = vsub.f32 0.0, %v1622
        %v1655 = vsub.f32 0.0, %v1624
        %v1656 = vsub.f32 0.0, %v1626
        %v1657 = vsub.f32 0.0, %v1628
        %v1658 = vsub.f32 0.0, %v1632
        %v1659 = vsub.f32 0.0, %v1634
        %v1660 = vsub.f32 0.0, %v1636
        %v1661 = vsub.f32 0.0, %v1638
        %v1662 = vsub.f32 0.0, %v1642
        %v1663 = vsub.f32 0.0, %v1644
        %v1664 = vsub.f32 0.0, %v1646
        %v1665 = vsub.f32 0.0, %v1648
        %v1666 = vmul.f32 %v1650, 1.442695
        %v1667 = vpow.pop %v1666
        %v1668 = vmul.f32 %v1651, 1.442695
        %v1669 = vpow.pop %v1668
        %v1670 = vmul.f32 %v1652, 1.442695
        %v1671 = vpow.pop %v1670
        %v1672 = vmul.f32 %v1653, 1.442695
        %v1673 = vpow.pop %v1672
        %v1674 = vmul.f32 %v1654, 1.442695
        %v1675 = vpow.pop %v1674
        %v1676 = vmul.f32 %v1655, 1.442695
        %v1677 = vpow.pop %v1676
        %v1678 = vmul.f32 %v1656, 1.442695
        %v1679 = vpow.pop %v1678
        %v1680 = vmul.f32 %v1657, 1.442695
        %v1681 = vpow.pop %v1680
        %v1682 = vmul.f32 %v1658, 1.442695
        %v1683 = vpow.pop %v1682
        %v1684 = vmul.f32 %v1659, 1.442695
        %v1685 = vpow.pop %v1684
        %v1686 = vmul.f32 %v1660, 1.442695
        %v1687 = vpow.pop %v1686
        %v1688 = vmul.f32 %v1661, 1.442695
        %v1689 = vpow.pop %v1688
        %v1690 = vmul.f32 %v1662, 1.442695
        %v1691 = vpow.pop %v1690
        %v1692 = vmul.f32 %v1663, 1.442695
        %v1693 = vpow.pop %v1692
        %v1694 = vmul.f32 %v1664, 1.442695
        %v1695 = vpow.pop %v1694
        %v1696 = vmul.f32 %v1665, 1.442695
        %v1697 = vpow.pop %v1696
        %v1698 = vadd.f32 %v1667, 1.0
        %v1699 = vadd.f32 %v1669, 1.0
        %v1700 = vadd.f32 %v1671, 1.0
        %v1701 = vadd.f32 %v1673, 1.0
        %v1702 = vadd.f32 %v1675, 1.0
        %v1703 = vadd.f32 %v1677, 1.0
        %v1704 = vadd.f32 %v1679, 1.0
        %v1705 = vadd.f32 %v1681, 1.0
        %v1706 = vadd.f32 %v1683, 1.0
        %v1707 = vadd.f32 %v1685, 1.0
        %v1708 = vadd.f32 %v1687, 1.0
        %v1709 = vadd.f32 %v1689, 1.0
        %v1710 = vadd.f32 %v1691, 1.0
        %v1711 = vadd.f32 %v1693, 1.0
        %v1712 = vadd.f32 %v1695, 1.0
        %v1713 = vadd.f32 %v1697, 1.0
        %v1714 = vrcp.pop %v1698
        %v1715 = vrcp.pop %v1699
        %v1716 = vrcp.pop %v1700
        %v1717 = vrcp.pop %v1701
        %v1718 = vrcp.pop %v1702
        %v1719 = vrcp.pop %v1703
        %v1720 = vrcp.pop %v1704
        %v1721 = vrcp.pop %v1705
        %v1722 = vrcp.pop %v1706
        %v1723 = vrcp.pop %v1707
        %v1724 = vrcp.pop %v1708
        %v1725 = vrcp.pop %v1709
        %v1726 = vrcp.pop %v1710
        %v1727 = vrcp.pop %v1711
        %v1728 = vrcp.pop %v1712
        %v1729 = vrcp.pop %v1713
        %v1730 = vmul.f32 %v1612, %v1714
        %v1731 = vmul.f32 %v1614, %v1715
        %v1732 = vmul.f32 %v1616, %v1716
        %v1733 = vmul.f32 %v1618, %v1717
        %v1734 = vmul.f32 %v1622, %v1718
        %v1735 = vmul.f32 %v1624, %v1719
        %v1736 = vmul.f32 %v1626, %v1720
        %v1737 = vmul.f32 %v1628, %v1721
        %v1738 = vmul.f32 %v1632, %v1722
        %v1739 = vmul.f32 %v1634, %v1723
        %v1740 = vmul.f32 %v1636, %v1724
        %v1741 = vmul.f32 %v1638, %v1725
        %v1742 = vmul.f32 %v1642, %v1726
        %v1743 = vmul.f32 %v1644, %v1727
        %v1744 = vmul.f32 %v1646, %v1728
        %v1745 = vmul.f32 %v1648, %v1729
        %1746 = vst [vmem:[%s242] sm:$0xff] %v1730
        %1747 = vst [vmem:[%s242 + $0x8] sm:$0xff] %v1731
        %1748 = vst [vmem:[%s242 + $0x10] sm:$0xff] %v1732
        %1749 = vst [vmem:[%s242 + $0x18] sm:$0xff] %v1733
        %1750 = vst [vmem:[%s242 + $0x20] sm:$0xff] %v1734
        %1751 = vst [vmem:[%s242 + $0x28] sm:$0xff] %v1735
        %1752 = vst [vmem:[%s242 + $0x30] sm:$0xff] %v1736
        %1753 = vst [vmem:[%s242 + $0x38] sm:$0xff] %v1737
        %1754 = vst [vmem:[%s242 + $0x40] sm:$0xff] %v1738
        %1755 = vst [vmem:[%s242 + $0x48] sm:$0xff] %v1739
        %1756 = vst [vmem:[%s242 + $0x50] sm:$0xff] %v1740
        %1757 = vst [vmem:[%s242 + $0x58] sm:$0xff] %v1741
        %1758 = vst [vmem:[%s242 + $0x60] sm:$0xff] %v1742
        %1759 = vst [vmem:[%s242 + $0x68] sm:$0xff] %v1743
        %1760 = vst [vmem:[%s242 + $0x70] sm:$0xff] %v1744
        %1761 = vst [vmem:[%s242 + $0x78] sm:$0xff] %v1745
        %s1762 = sand.u32 %s140, 1
        %s1763 = scalar_lea.sflag [#allocation4], %s1762
        %s1764 = sand.u32 %s140, 1
        %s1765 = smul.addr %s1764, 128
        %s1766 = scalar_lea.vmem [#allocation5], %s1765
        // Predicated region
        $region45: #{tpu_custom_call.1} parent=39 // pred_check
          %p1767 = pneg %p150
        $region46: #{tpu_custom_call.1} parent=39 // pred_check_branch
          %1769 = sbr.rel (%p1767) target = $region48
        $region47: #{tpu_custom_call.1} parent=39 // pred_region
          %s1771 = ssub.s32 2048, 2048
          %1772 = vsyncadd %s1763, %s1771
          %s1773 = smul.addr %s22, 16
          %s1774 = smul.addr %s1773, 128
          %s1775 = scalar_lea.hbm %s5, %s1774
          %s1776 = sshll.u32 %s1766, 4
          %s1777 = int_to_ptr.vmem [resolvable:$true] %s1776
          %1782 = dma.vmem_to_hbm [thread:$0]  %s1777, 2048, %s1775, %s1763, 256, 256, 16
        $region48: #{tpu_custom_call.1} parent=39 // pred_fallthru
          _
      $region40: #{tpu_custom_call.1} parent=5 // pred_fallthru
        _
      %p1783 = scmp.le.s32.totalorder 2, %s17
      // Predicated region
      $region49: #{tpu_custom_call.1} parent=5 // pred_check
        %p1784 = pneg %p1783
      $region50: #{tpu_custom_call.1} parent=5 // pred_check_branch
        %1786 = sbr.rel (%p1784) target = $region52
      $region51: #{tpu_custom_call.1} parent=5 // pred_region
        %s1787 = ssub.s32 %s17, 2
        // Predicated region
        $region53: #{tpu_custom_call.1} parent=51 // pred_check
          %p1788 = pneg %p156
        $region54: #{tpu_custom_call.1} parent=51 // pred_check_branch
          %1790 = sbr.rel (%p1788) target = $region56
        $region55: #{tpu_custom_call.1} parent=51 // pred_region
          %s1791 = sand.u32 %s141, 1
          %s1792 = scalar_lea.sflag [#allocation4], %s1791
          %s1793 = sand.u32 %s141, 1
          %s1794 = smul.addr %s1793, 128
          %s1795 = scalar_lea.vmem [#allocation5], %s1794
          %1796 = dma.done %s1792, 2048
        $region56: #{tpu_custom_call.1} parent=51 // pred_fallthru
          _
      $region52: #{tpu_custom_call.1} parent=5 // pred_fallthru
        _
    $region6: #{tpu_custom_call.1} parent=1 // loop_footer
      %s21 = sadd.s32 1, %s17
    $region7: #{tpu_custom_call.1} parent=1 // loop_footer_branch
      %16 = sbr.rel target = $region3
    $region8: #{tpu_custom_call.1} parent=1 // loop_exit
      _
    %1797 = vsyncpa [#allocation3], 1
    %s1798 = scalar_lea.sflag [#allocation3], 1
    %1799 = vsyncpa %s1798, 1
    %1800 = vsyncpa [#allocation4], 1
    %s1801 = scalar_lea.sflag [#allocation4], 1
    %1802 = vsyncpa %s1801, 1

</llo_original>
